<compile_context>
chip_gen: v7x
topology: tpu7x:2x2x1
jax: 0.10.0
libtpu: 0.0.40
codegen_flags: <defaults>
</compile_context>

<pallas_src>
import jax
import jax.numpy as jnp
from jax.experimental import pallas as pl
from jax.experimental.pallas import tpu as pltpu


def agcrn_cell_kernel(adj_obs_ref, xh_ref, qv_ref, h_obs_ref, x_obs_ref,
                      wru_ref, wc_ref, out_ref):
    c_pad = xh_ref.shape[1]          # padded combined-feature width (128)
    num_q = qv_ref.shape[1]          # Q
    hidden = out_ref.shape[1]        # I
    m = qv_ref.shape[0]              # M (observed nodes)

    qv = qv_ref[...]                                            # [M, Q] f32
    # Extra K-tile that carries the folded bias contribution (qv @ b_pool).
    qv_bias_tile = jnp.concatenate(
        [qv, jnp.zeros((m, c_pad - num_q), jnp.float32)], axis=-1)  # [M, Cp]

    # Graph conv fused with the observed-row gather (adj rows pre-gathered in
    # glue):  combined[nodes_ind] = adj[nodes_ind] @ [x | h | 0-pad]
    # bf16 x bf16 -> f32 accumulate on the MXU.
    cgc = jnp.dot(adj_obs_ref[...], xh_ref[...],
                  preferred_element_type=jnp.float32)           # [M, Cp] f32

    # LOCKED LAYOUT: z columns are [q=0 tile | q=1 tile | ... | q=Q-1 tile |
    # bias tile], each tile Cp=128 lanes wide.  This must match the row order
    # produced by prepare_agcrn_params() (reshape(Q*Cp, O) + appended bias
    # rows).  Built in f32 on the VPU; cast to bf16 only at the MXU boundary.
    def build_z(feat):                                          # feat: [M, Cp]
        parts = [qv[:, q:q + 1] * feat for q in range(num_q)]
        parts.append(qv_bias_tile)
        return jnp.concatenate(parts, axis=-1)                  # [M, (Q+1)*Cp]

    # r and u fused into one matmul with a 2I-wide output (bias folded in).
    z1 = build_z(cgc)
    ru = jax.nn.sigmoid(
        jnp.dot(z1.astype(wru_ref.dtype), wru_ref[...],
                preferred_element_type=jnp.float32))            # [M, 2I] f32
    r = ru[:, :hidden]
    u = ru[:, hidden:]

    # h[nodes_ind] = r * h[nodes_ind]
    h_r = r * h_obs_ref[...]                                    # [M, I] f32

    # Candidate-gate input laid out as [h_r | x_obs | 0...] to match the
    # reordered candidate weight pool built at init (no graph conv, per spec).
    tail = c_pad - hidden - x_obs_ref.shape[1]
    c2 = jnp.concatenate(
        [h_r, x_obs_ref[...], jnp.zeros((m, tail), jnp.float32)],
        axis=-1)                                                # [M, Cp] f32
    z2 = build_z(c2)
    cand = jnp.tanh(
        jnp.dot(z2.astype(wc_ref.dtype), wc_ref[...],
                preferred_element_type=jnp.float32))            # [M, I] f32

    out_ref[...] = ((1.0 - u) * h_r + u * cand).astype(out_ref.dtype)


def prepare_agcrn_params(params, *, c_pad=128, weight_dtype=jnp.bfloat16):
    """One-time parameter prep (call at init, NOT per forward step).

    Builds flattened, zero-padded, bias-folded, bf16 weight pools:
      w_ru: [(Q+1)*Cp, 2I]   (r and u fused along the output axis)
      w_c : [(Q+1)*Cp,  I]   (rows reordered: h-part first, then x-part)
    Row order q*Cp + c (weights) followed by one Cp-row bias block is LOCKED
    to the z-column layout produced by build_z() in the kernel.
    """
    w_r, w_u, w_c_raw = params['Wr'], params['Wu'], params['Wc']
    b_r, b_u, b_c = params['br'], params['bu'], params['bc']
    num_q, comb, hidden = w_r.shape
    xin = comb - hidden                       # I + 1

    def flat_pad_with_bias(w, b):             # [Q, comb, O] + [Q, O]
        w_flat = jnp.pad(w, ((0, 0), (0, c_pad - comb), (0, 0))
                         ).reshape(num_q * c_pad, -1)            # [Q*Cp, O]
        b_rows = jnp.pad(b, ((0, c_pad - num_q), (0, 0)))        # [Cp, O]
        return jnp.concatenate([w_flat, b_rows], axis=0).astype(weight_dtype)

    w_ru = flat_pad_with_bias(jnp.concatenate([w_r, w_u], axis=-1),
                              jnp.concatenate([b_r, b_u], axis=-1))
    # Candidate weights reordered (h-part rows first, then x-part rows) so the
    # kernel can feed [h_r | x_obs | 0] without shifting h_r to column I+1.
    w_c_reord = jnp.concatenate([w_c_raw[:, xin:, :], w_c_raw[:, :xin, :]],
                                axis=1)
    w_c = flat_pad_with_bias(w_c_reord, b_c)
    return {'w_ru': w_ru, 'w_c': w_c}


def agcrn_cell_forward(x, h, query_vectors, adj, nodes_ind, prep):
    """Per-step forward. Returns new_h for the observed nodes, shape [M, I]."""
    num_nodes, xin = x.shape                  # xin = I + 1
    hidden = h.shape[1]                       # I
    comb = xin + hidden                       # 2I + 1
    num_obs = nodes_ind.shape[0]              # M
    c_pad = max(128, ((comb + 127) // 128) * 128)

    # --- per-step glue: only input-dependent gathers / pad / bf16 casts ------
    adj_obs = adj[nodes_ind].astype(jnp.bfloat16)                # [M, N]
    x_obs = x[nodes_ind]                                         # [M, I+1] f32
    h_obs = h[nodes_ind]                                         # [M, I]   f32
    xh_pad = jnp.pad(jnp.concatenate([x, h], axis=-1),
                     ((0, 0), (0, c_pad - comb))).astype(jnp.bfloat16)  # [N,Cp]

    vmem = pl.BlockSpec(memory_space=pltpu.MemorySpace.VMEM)
    operands = (adj_obs, xh_pad, query_vectors, h_obs, x_obs,
                prep['w_ru'], prep['w_c'])

    return pl.pallas_call(
        agcrn_cell_kernel,
        out_shape=jax.ShapeDtypeStruct((num_obs, hidden), x.dtype),
        in_specs=[vmem] * len(operands),
        out_specs=vmem,
    )(*operands)


def agcrn_cell_reference(x, h, query_vectors, adj, nodes_ind, params):
    """Pure-JAX f32 reference mirroring the PyTorch forward literally."""
    def gate(c, w_pool, b_pool):
        w_n = jnp.einsum('nq,qio->nio', query_vectors, w_pool)
        b_n = query_vectors @ b_pool
        return jnp.einsum('ni,nio->no', c, w_n) + b_n

    combined = jnp.concatenate([x, h], axis=-1)
    combined = adj @ combined
    c_obs = combined[nodes_ind]
    r = jax.nn.sigmoid(gate(c_obs, params['Wr'], params['br']))
    u = jax.nn.sigmoid(gate(c_obs, params['Wu'], params['bu']))
    h = h.at[nodes_ind].set(r * h[nodes_ind])
    combined_new = jnp.concatenate([x, h], axis=-1)
    cand = jnp.tanh(gate(combined_new[nodes_ind], params['Wc'], params['bc']))
    return (1.0 - u) * h[nodes_ind] + u * cand


if __name__ == "__main__":
    key = jax.random.PRNGKey(0)
    num_nodes = 16        # N
    input_size = 32       # I  (hidden size of the cell)
    query_dim = 8         # Q
    comb_dim = 2 * input_size + 1
    # The forward requires cat([x, h]) to have 2*I+1 features -> x has I+1.
    nodes_ind = jnp.array([0, 2, 3, 5, 7, 8, 11, 13], dtype=jnp.int32)
    num_obs = nodes_ind.shape[0]   # M

    ks = jax.random.split(key, 10)
    x = jax.random.normal(ks[0], (num_nodes, input_size + 1), jnp.float32)
    h = jax.random.normal(ks[1], (num_nodes, input_size), jnp.float32)
    adj = jax.nn.softmax(jax.random.normal(ks[2], (num_nodes, num_nodes),
                                           jnp.float32), axis=-1)
    query_vectors = jax.random.normal(ks[3], (num_obs, query_dim), jnp.float32)

    def xavier(k, shape, fan_in, fan_out):
        lim = (6.0 / (fan_in + fan_out)) ** 0.5
        return jax.random.uniform(k, shape, jnp.float32, -lim, lim)

    params = {
        'Wr': xavier(ks[4], (query_dim, comb_dim, input_size),
                     comb_dim * input_size, query_dim * input_size),
        'br': xavier(ks[5], (query_dim, input_size), query_dim, input_size),
        'Wu': xavier(ks[6], (query_dim, comb_dim, input_size),
                     comb_dim * input_size, query_dim * input_size),
        'bu': xavier(ks[7], (query_dim, input_size), query_dim, input_size),
        'Wc': xavier(ks[8], (query_dim, comb_dim, input_size),
                     comb_dim * input_size, query_dim * input_size),
        'bc': xavier(ks[9], (query_dim, input_size), query_dim, input_size),
    }

    # One-time parameter prep (hoisted out of the per-step path).
    prep = prepare_agcrn_params(params)
    prep = jax.tree_util.tree_map(jax.block_until_ready, prep)

    fwd = jax.jit(agcrn_cell_forward)
    out = jax.block_until_ready(
        fwd(x, h, query_vectors, adj, nodes_ind, prep))

    ref = jax.block_until_ready(
        agcrn_cell_reference(x, h, query_vectors, adj, nodes_ind, params))
    max_err = float(jnp.max(jnp.abs(out - ref)))
    assert out.shape == (num_obs, input_size)
    # bf16 weights / matmul inputs with f32 accumulation -> slightly looser tol.
    assert max_err < 2e-2, f"mismatch vs reference: {max_err}"

    print("KERNEL_OK")
</pallas_src>

<mosaic_0001>
module attributes {stable_mosaic.version = 11 : i64} {
  func.func @agcrn_cell_kernel(%arg0: memref<8x16xbf16, #tpu.memory_space<vmem>>, %arg1: memref<16x128xbf16, #tpu.memory_space<vmem>>, %arg2: memref<8x8xf32, #tpu.memory_space<vmem>>, %arg3: memref<8x32xf32, #tpu.memory_space<vmem>>, %arg4: memref<8x33xf32, #tpu.memory_space<vmem>>, %arg5: memref<1152x64xbf16, #tpu.memory_space<vmem>>, %arg6: memref<1152x32xbf16, #tpu.memory_space<vmem>>, %arg7: memref<8x32xf32, #tpu.memory_space<vmem>>) attributes {dimension_semantics = [], scalar_prefetch = 0 : i64, scratch_operands = 0 : i64, tpu.core_type = #tpu.core_type<tc>} {
    %c0 = arith.constant 0 : index
    %c0_0 = arith.constant 0 : index
    %0 = vector.load %arg2[%c0, %c0_0] : memref<8x8xf32, #tpu.memory_space<vmem>>, vector<8x8xf32>
    %cst = arith.constant 0.000000e+00 : f32
    %1 = vector.broadcast %cst : f32 to vector<8x120xf32>
    %2 = tpu.concatenate %0, %1 in 1 : vector<8x8xf32>, vector<8x120xf32> -> vector<8x128xf32>
    %c0_1 = arith.constant 0 : index
    %c0_2 = arith.constant 0 : index
    %3 = vector.load %arg0[%c0_1, %c0_2] : memref<8x16xbf16, #tpu.memory_space<vmem>>, vector<8x16xbf16>
    %c0_3 = arith.constant 0 : index
    %c0_4 = arith.constant 0 : index
    %4 = vector.load %arg1[%c0_3, %c0_4] : memref<16x128xbf16, #tpu.memory_space<vmem>>, vector<16x128xbf16>
    %cst_5 = arith.constant dense<0.000000e+00> : vector<8x128xf32>
    %5 = tpu.matmul %3, %4, %cst_5 {dimension_numbers = #tpu.dot_dimension_numbers<[1], [0], [0], [1], [0, 0, 1, 1], [], []>} : vector<8x16xbf16>, vector<16x128xbf16>, vector<8x128xf32> -> vector<8x128xf32>
    %6 = vector.extract_strided_slice %0 {offsets = [0, 0], sizes = [8, 1], strides = [1, 1]} : vector<8x8xf32> to vector<8x1xf32>
    %7 = vector.broadcast %6 : vector<8x1xf32> to vector<8x128xf32>
    %8 = arith.mulf %7, %5 : vector<8x128xf32>
    %9 = vector.extract_strided_slice %0 {offsets = [0, 1], sizes = [8, 1], strides = [1, 1]} : vector<8x8xf32> to vector<8x1xf32>
    %10 = vector.broadcast %9 : vector<8x1xf32> to vector<8x128xf32>
    %11 = arith.mulf %10, %5 : vector<8x128xf32>
    %12 = vector.extract_strided_slice %0 {offsets = [0, 2], sizes = [8, 1], strides = [1, 1]} : vector<8x8xf32> to vector<8x1xf32>
    %13 = vector.broadcast %12 : vector<8x1xf32> to vector<8x128xf32>
    %14 = arith.mulf %13, %5 : vector<8x128xf32>
    %15 = vector.extract_strided_slice %0 {offsets = [0, 3], sizes = [8, 1], strides = [1, 1]} : vector<8x8xf32> to vector<8x1xf32>
    %16 = vector.broadcast %15 : vector<8x1xf32> to vector<8x128xf32>
    %17 = arith.mulf %16, %5 : vector<8x128xf32>
    %18 = vector.extract_strided_slice %0 {offsets = [0, 4], sizes = [8, 1], strides = [1, 1]} : vector<8x8xf32> to vector<8x1xf32>
    %19 = vector.broadcast %18 : vector<8x1xf32> to vector<8x128xf32>
    %20 = arith.mulf %19, %5 : vector<8x128xf32>
    %21 = vector.extract_strided_slice %0 {offsets = [0, 5], sizes = [8, 1], strides = [1, 1]} : vector<8x8xf32> to vector<8x1xf32>
    %22 = vector.broadcast %21 : vector<8x1xf32> to vector<8x128xf32>
    %23 = arith.mulf %22, %5 : vector<8x128xf32>
    %24 = vector.extract_strided_slice %0 {offsets = [0, 6], sizes = [8, 1], strides = [1, 1]} : vector<8x8xf32> to vector<8x1xf32>
    %25 = vector.broadcast %24 : vector<8x1xf32> to vector<8x128xf32>
    %26 = arith.mulf %25, %5 : vector<8x128xf32>
    %27 = vector.extract_strided_slice %0 {offsets = [0, 7], sizes = [8, 1], strides = [1, 1]} : vector<8x8xf32> to vector<8x1xf32>
    %28 = vector.broadcast %27 : vector<8x1xf32> to vector<8x128xf32>
    %29 = arith.mulf %28, %5 : vector<8x128xf32>
    %30 = tpu.concatenate %8, %11, %14, %17, %20, %23, %26, %29, %2 in 1 : vector<8x128xf32>, vector<8x128xf32>, vector<8x128xf32>, vector<8x128xf32>, vector<8x128xf32>, vector<8x128xf32>, vector<8x128xf32>, vector<8x128xf32>, vector<8x128xf32> -> vector<8x1152xf32>
    %31 = arith.truncf %30 : vector<8x1152xf32> to vector<8x1152xbf16>
    %c0_6 = arith.constant 0 : index
    %c0_7 = arith.constant 0 : index
    %32 = vector.load %arg5[%c0_6, %c0_7] : memref<1152x64xbf16, #tpu.memory_space<vmem>>, vector<1152x64xbf16>
    %cst_8 = arith.constant dense<0.000000e+00> : vector<8x64xf32>
    %33 = tpu.matmul %31, %32, %cst_8 {dimension_numbers = #tpu.dot_dimension_numbers<[1], [0], [0], [1], [0, 0, 1, 1], [], []>} : vector<8x1152xbf16>, vector<1152x64xbf16>, vector<8x64xf32> -> vector<8x64xf32>
    %34 = arith.negf %33 : vector<8x64xf32>
    %35 = math.exp %34 : vector<8x64xf32>
    %cst_9 = arith.constant 1.000000e+00 : f32
    %36 = vector.broadcast %cst_9 : f32 to vector<8x64xf32>
    %37 = arith.addf %36, %35 : vector<8x64xf32>
    %38 = arith.divf %36, %37 : vector<8x64xf32>
    %39 = vector.extract_strided_slice %38 {offsets = [0, 0], sizes = [8, 32], strides = [1, 1]} : vector<8x64xf32> to vector<8x32xf32>
    %40 = vector.extract_strided_slice %38 {offsets = [0, 32], sizes = [8, 32], strides = [1, 1]} : vector<8x64xf32> to vector<8x32xf32>
    %c0_10 = arith.constant 0 : index
    %c0_11 = arith.constant 0 : index
    %41 = vector.load %arg3[%c0_10, %c0_11] : memref<8x32xf32, #tpu.memory_space<vmem>>, vector<8x32xf32>
    %42 = arith.mulf %39, %41 : vector<8x32xf32>
    %c0_12 = arith.constant 0 : index
    %c0_13 = arith.constant 0 : index
    %43 = vector.load %arg4[%c0_12, %c0_13] : memref<8x33xf32, #tpu.memory_space<vmem>>, vector<8x33xf32>
    %cst_14 = arith.constant 0.000000e+00 : f32
    %44 = vector.broadcast %cst_14 : f32 to vector<8x63xf32>
    %45 = tpu.concatenate %42, %43, %44 in 1 : vector<8x32xf32>, vector<8x33xf32>, vector<8x63xf32> -> vector<8x128xf32>
    %46 = vector.extract_strided_slice %0 {offsets = [0, 0], sizes = [8, 1], strides = [1, 1]} : vector<8x8xf32> to vector<8x1xf32>
    %47 = vector.broadcast %46 : vector<8x1xf32> to vector<8x128xf32>
    %48 = arith.mulf %47, %45 : vector<8x128xf32>
    %49 = vector.extract_strided_slice %0 {offsets = [0, 1], sizes = [8, 1], strides = [1, 1]} : vector<8x8xf32> to vector<8x1xf32>
    %50 = vector.broadcast %49 : vector<8x1xf32> to vector<8x128xf32>
    %51 = arith.mulf %50, %45 : vector<8x128xf32>
    %52 = vector.extract_strided_slice %0 {offsets = [0, 2], sizes = [8, 1], strides = [1, 1]} : vector<8x8xf32> to vector<8x1xf32>
    %53 = vector.broadcast %52 : vector<8x1xf32> to vector<8x128xf32>
    %54 = arith.mulf %53, %45 : vector<8x128xf32>
    %55 = vector.extract_strided_slice %0 {offsets = [0, 3], sizes = [8, 1], strides = [1, 1]} : vector<8x8xf32> to vector<8x1xf32>
    %56 = vector.broadcast %55 : vector<8x1xf32> to vector<8x128xf32>
    %57 = arith.mulf %56, %45 : vector<8x128xf32>
    %58 = vector.extract_strided_slice %0 {offsets = [0, 4], sizes = [8, 1], strides = [1, 1]} : vector<8x8xf32> to vector<8x1xf32>
    %59 = vector.broadcast %58 : vector<8x1xf32> to vector<8x128xf32>
    %60 = arith.mulf %59, %45 : vector<8x128xf32>
    %61 = vector.extract_strided_slice %0 {offsets = [0, 5], sizes = [8, 1], strides = [1, 1]} : vector<8x8xf32> to vector<8x1xf32>
    %62 = vector.broadcast %61 : vector<8x1xf32> to vector<8x128xf32>
    %63 = arith.mulf %62, %45 : vector<8x128xf32>
    %64 = vector.extract_strided_slice %0 {offsets = [0, 6], sizes = [8, 1], strides = [1, 1]} : vector<8x8xf32> to vector<8x1xf32>
    %65 = vector.broadcast %64 : vector<8x1xf32> to vector<8x128xf32>
    %66 = arith.mulf %65, %45 : vector<8x128xf32>
    %67 = vector.extract_strided_slice %0 {offsets = [0, 7], sizes = [8, 1], strides = [1, 1]} : vector<8x8xf32> to vector<8x1xf32>
    %68 = vector.broadcast %67 : vector<8x1xf32> to vector<8x128xf32>
    %69 = arith.mulf %68, %45 : vector<8x128xf32>
    %70 = tpu.concatenate %48, %51, %54, %57, %60, %63, %66, %69, %2 in 1 : vector<8x128xf32>, vector<8x128xf32>, vector<8x128xf32>, vector<8x128xf32>, vector<8x128xf32>, vector<8x128xf32>, vector<8x128xf32>, vector<8x128xf32>, vector<8x128xf32> -> vector<8x1152xf32>
    %71 = arith.truncf %70 : vector<8x1152xf32> to vector<8x1152xbf16>
    %c0_15 = arith.constant 0 : index
    %c0_16 = arith.constant 0 : index
    %72 = vector.load %arg6[%c0_15, %c0_16] : memref<1152x32xbf16, #tpu.memory_space<vmem>>, vector<1152x32xbf16>
    %cst_17 = arith.constant dense<0.000000e+00> : vector<8x32xf32>
    %73 = tpu.matmul %71, %72, %cst_17 {dimension_numbers = #tpu.dot_dimension_numbers<[1], [0], [0], [1], [0, 0, 1, 1], [], []>} : vector<8x1152xbf16>, vector<1152x32xbf16>, vector<8x32xf32> -> vector<8x32xf32>
    %74 = math.tanh %73 : vector<8x32xf32>
    %cst_18 = arith.constant 1.000000e+00 : f32
    %75 = vector.broadcast %cst_18 : f32 to vector<8x32xf32>
    %76 = arith.subf %75, %40 : vector<8x32xf32>
    %77 = arith.mulf %76, %42 : vector<8x32xf32>
    %78 = arith.mulf %40, %74 : vector<8x32xf32>
    %79 = arith.addf %77, %78 : vector<8x32xf32>
    %c0_19 = arith.constant 0 : index
    %c0_20 = arith.constant 0 : index
    %80 = vector.load %arg7[%c0_19, %c0_20] : memref<8x32xf32, #tpu.memory_space<vmem>>, vector<8x32xf32>
    tpu.vector_store %arg7[%c0_19, %c0_20], %79 {strides = array<i32>} : memref<8x32xf32, #tpu.memory_space<vmem>>, vector<8x32xf32>,
    return
  }
}

</mosaic_0001>

<llo_original>
// kernel: agcrn_cell_forward.1
$region0: #{agcrn_cell_forward.1}
  #allocation0 [shape = 'u32[]', space=smem, size = 0x4, offset = 0x4, fixed_abs, tag = 'smem constant byte address 0x4 - core index']
  #allocation1 [shape = 'u32[144,128]{1,0:T(1,128)}', space=vmem, size = 0x12000, scoped, tag = 'internal scratch']
  %s0 = inlined_call_operand.vmem [shape: bf16[8,16], index: 0, kind: input, shape index: {}]
  %s1 = inlined_call_operand.vmem [shape: bf16[16,128], index: 1, kind: input, shape index: {}]
  %s2 = inlined_call_operand.vmem [shape: f32[8,8], index: 2, kind: input, shape index: {}]
  %s3 = inlined_call_operand.vmem [shape: f32[8,32], index: 3, kind: input, shape index: {}]
  %s4 = inlined_call_operand.vmem [shape: f32[8,33], index: 4, kind: input, shape index: {}]
  %s5 = inlined_call_operand.vmem [shape: bf16[1152,64], index: 5, kind: input, shape index: {}]
  %s6 = inlined_call_operand.vmem [shape: bf16[1152,32], index: 6, kind: input, shape index: {}]
  %s7 = inlined_call_operand.hbm [shape: f32[8,32], index: 7, kind: output, shape index: {}]
  %s8 = sld [smem:[#allocation0]]
  $region38: #{agcrn_cell_forward.1} parent=0
    _
  %s10 = ssub.s32 1, %s8
  %s11 = scalar_select 0, %s10, %s8
  $region1: #{agcrn_cell_forward.1} parent=0
    #allocation2 [shape = 'u8[4096]{0}', space=vmem, size = 0x1000, scoped, tag = 'output window, operand 0, single buffered']
    #allocation3 [shape = 's32[1]{0}', space=sflag, size = 0x4, scoped, tag = 'scoped memory for agcrn_cell_forward.1']
    %12 = vsyncpa [#allocation3], 0
    // Predicated region
    $region2: #{agcrn_cell_forward.1} parent=1 // pred_check
      _
    $region3: #{agcrn_cell_forward.1} parent=1 // pred_check_branch
      %14 = sbr.rel (0) target = $region5
    $region4: #{agcrn_cell_forward.1} parent=1 // pred_region
      _
    $region5: #{agcrn_cell_forward.1} parent=1 // pred_fallthru
      _
    // Predicated region
    $region6: #{agcrn_cell_forward.1} parent=1 // pred_check
      _
    $region7: #{agcrn_cell_forward.1} parent=1 // pred_check_branch
      %16 = sbr.rel (0) target = $region9
    $region8: #{agcrn_cell_forward.1} parent=1 // pred_region
      _
    $region9: #{agcrn_cell_forward.1} parent=1 // pred_fallthru
      _
    // Predicated region
    $region10: #{agcrn_cell_forward.1} parent=1 // pred_check
      _
    $region11: #{agcrn_cell_forward.1} parent=1 // pred_check_branch
      %18 = sbr.rel (0) target = $region13
    $region12: #{agcrn_cell_forward.1} parent=1 // pred_region
      _
    $region13: #{agcrn_cell_forward.1} parent=1 // pred_fallthru
      _
    // Predicated region
    $region14: #{agcrn_cell_forward.1} parent=1 // pred_check
      _
    $region15: #{agcrn_cell_forward.1} parent=1 // pred_check_branch
      %20 = sbr.rel (0) target = $region17
    $region16: #{agcrn_cell_forward.1} parent=1 // pred_region
      _
    $region17: #{agcrn_cell_forward.1} parent=1 // pred_fallthru
      _
    // Predicated region
    $region18: #{agcrn_cell_forward.1} parent=1 // pred_check
      _
    $region19: #{agcrn_cell_forward.1} parent=1 // pred_check_branch
      %22 = sbr.rel (0) target = $region21
    $region20: #{agcrn_cell_forward.1} parent=1 // pred_region
      _
    $region21: #{agcrn_cell_forward.1} parent=1 // pred_fallthru
      _
    // Predicated region
    $region22: #{agcrn_cell_forward.1} parent=1 // pred_check
      _
    $region23: #{agcrn_cell_forward.1} parent=1 // pred_check_branch
      %24 = sbr.rel (0) target = $region25
    $region24: #{agcrn_cell_forward.1} parent=1 // pred_region
      _
    $region25: #{agcrn_cell_forward.1} parent=1 // pred_fallthru
      _
    // Predicated region
    $region26: #{agcrn_cell_forward.1} parent=1 // pred_check
      _
    $region27: #{agcrn_cell_forward.1} parent=1 // pred_check_branch
      %26 = sbr.rel (0) target = $region29
    $region28: #{agcrn_cell_forward.1} parent=1 // pred_region
      _
    $region29: #{agcrn_cell_forward.1} parent=1 // pred_fallthru
      _
    %v28 = vld [vmem:[%s2] sm:$0xff]
    %vm29 = vcmask 64512
    %v30 = vsel %vm29, %v28, 0.0
    %v31 = vld [vmem:[%s0] sm:$0xf]
    %v32 = vld [vmem:[%s1] sm:$0xf]
    %v33 = vld [vmem:[%s1 + $0x4] sm:$0xf]
    %v36 = vunpack.c.l.b16 %v32
    %v37 = vunpack.c.l.b16 %v33
    %v38 = vpack.c.b16 %v37, %v36
    %vm40 = vcmask 130048
    %v42 = vsel %vm40, %v31, 0
    %44 = vmatprep.subr.bf16.mxu0 0
    %45 = vmatpush1.bf16.msra.mxu0 %v38
    %46 = vmatprep.subr.bf16.mxu0 0
    %47 = vmatpush1.bf16.msra.mxu0 0
    %48 = vmatprep.subr.bf16.mxu0 0
    %49 = vmatpush1.bf16.msra.mxu0 0
    %50 = vmatprep.subr.bf16.mxu0 0
    %51 = vmatpush1.bf16.msra.mxu0 0
    %52 = vmatprep.subr.bf16.mxu0 0
    %53 = vmatpush1.bf16.msra.mxu0 0
    %54 = vmatprep.subr.bf16.mxu0 0
    %55 = vmatpush1.bf16.msra.mxu0 0
    %56 = vmatprep.subr.bf16.mxu0 0
    %57 = vmatpush1.bf16.msra.mxu0 0
    %58 = vmatprep.subr.bf16.mxu0 0
    %59 = vmatpush1.bf16.msra.mxu0 0
    %60 = vmatprep.subr.bf16.mxu0 0
    %61 = vmatpush1.bf16.msra.mxu0 0
    %62 = vmatprep.subr.bf16.mxu0 0
    %63 = vmatpush1.bf16.msra.mxu0 0
    %64 = vmatprep.subr.bf16.mxu0 0
    %65 = vmatpush1.bf16.msra.mxu0 0
    %66 = vmatprep.subr.bf16.mxu0 0
    %67 = vmatpush1.bf16.msra.mxu0 0
    %68 = vmatprep.subr.bf16.mxu0 0
    %69 = vmatpush1.bf16.msra.mxu0 0
    %70 = vmatprep.subr.bf16.mxu0 0
    %71 = vmatpush1.bf16.msra.mxu0 0
    %72 = vmatprep.subr.bf16.mxu0 0
    %73 = vmatpush1.bf16.msra.mxu0 0
    %74 = vmatprep.subr.bf16.mxu0 0
    %75 = vmatpush1.bf16.msra.mxu0 0
    %76 = vmatprep.mubr.bf16.mxu0 0
    %77 = vmatmul.mubr.bf16.gmra.mrb[0].mxu0 %v42
    %v78 = vpop.f32.mrb[0].mxu0
    %v79 = vadd.f32 0.0, %v78
    %v80 = vpop.f32.mrb[0].mxu0
    %v81 = vpop.f32.mrb[0].mxu0
    %v82 = vpop.f32.mrb[0].mxu0
    %83 = vdwg.mxu0
    %85 = vset.pattern.permute.xlu0 0
    %86 = vperm.xlu0 %85, %v28
    %v87 = vpop.permute.xlu0 %86
    %v89 = vmul.f32 %v87, %v79
    %90 = vset.pattern.permute.xlu0 1
    %91 = vperm.xlu0 %90, %v28
    %v92 = vpop.permute.xlu0 %91
    %v94 = vmul.f32 %v92, %v79
    %95 = vset.pattern.permute.xlu0 2
    %96 = vperm.xlu0 %95, %v28
    %v97 = vpop.permute.xlu0 %96
    %v99 = vmul.f32 %v97, %v79
    %100 = vset.pattern.permute.xlu0 3
    %101 = vperm.xlu0 %100, %v28
    %v102 = vpop.permute.xlu0 %101
    %v104 = vmul.f32 %v102, %v79
    %105 = vset.pattern.permute.xlu0 4
    %106 = vperm.xlu0 %105, %v28
    %v107 = vpop.permute.xlu0 %106
    %v109 = vmul.f32 %v107, %v79
    %110 = vset.pattern.permute.xlu0 5
    %111 = vperm.xlu0 %110, %v28
    %v112 = vpop.permute.xlu0 %111
    %v114 = vmul.f32 %v112, %v79
    %115 = vset.pattern.permute.xlu0 6
    %116 = vperm.xlu0 %115, %v28
    %v117 = vpop.permute.xlu0 %116
    %v119 = vmul.f32 %v117, %v79
    %120 = vset.pattern.permute.xlu0 7
    %121 = vperm.xlu0 %120, %v28
    %v122 = vpop.permute.xlu0 %121
    %v124 = vmul.f32 %v122, %v79
    %v125 = vpack.c.bf16 %v89, %v89
    %v126 = vpack.c.bf16 %v94, %v94
    %v127 = vpack.c.bf16 %v99, %v99
    %v128 = vpack.c.bf16 %v104, %v104
    %v129 = vpack.c.bf16 %v109, %v109
    %v130 = vpack.c.bf16 %v114, %v114
    %v131 = vpack.c.bf16 %v119, %v119
    %v132 = vpack.c.bf16 %v124, %v124
    %v133 = vpack.c.bf16 %v30, %v30
    %v134 = vld [vmem:[%s5] sm:$0xf]
    %v135 = vld [vmem:[%s5 + $0x4] sm:$0xf]
    %v136 = vld [vmem:[%s5 + $0x8] sm:$0xf]
    %v137 = vld [vmem:[%s5 + $0xc] sm:$0xf]
    %v138 = vld [vmem:[%s5 + $0x10] sm:$0xf]
    %v139 = vld [vmem:[%s5 + $0x14] sm:$0xf]
    %v140 = vld [vmem:[%s5 + $0x18] sm:$0xf]
    %v141 = vld [vmem:[%s5 + $0x1c] sm:$0xf]
    %v142 = vld [vmem:[%s5 + $0x20] sm:$0xf]
    %v143 = vld [vmem:[%s5 + $0x24] sm:$0xf]
    %v144 = vld [vmem:[%s5 + $0x28] sm:$0xf]
    %v145 = vld [vmem:[%s5 + $0x2c] sm:$0xf]
    %v146 = vld [vmem:[%s5 + $0x30] sm:$0xf]
    %v147 = vld [vmem:[%s5 + $0x34] sm:$0xf]
    %v148 = vld [vmem:[%s5 + $0x38] sm:$0xf]
    %v149 = vld [vmem:[%s5 + $0x3c] sm:$0xf]
    %v150 = vld [vmem:[%s5 + $0x40] sm:$0xf]
    %v151 = vld [vmem:[%s5 + $0x44] sm:$0xf]
    %v152 = vld [vmem:[%s5 + $0x48] sm:$0xf]
    %v153 = vld [vmem:[%s5 + $0x4c] sm:$0xf]
    %v154 = vld [vmem:[%s5 + $0x50] sm:$0xf]
    %v155 = vld [vmem:[%s5 + $0x54] sm:$0xf]
    %v156 = vld [vmem:[%s5 + $0x58] sm:$0xf]
    %v157 = vld [vmem:[%s5 + $0x5c] sm:$0xf]
    %v158 = vld [vmem:[%s5 + $0x60] sm:$0xf]
    %v159 = vld [vmem:[%s5 + $0x64] sm:$0xf]
    %v160 = vld [vmem:[%s5 + $0x68] sm:$0xf]
    %v161 = vld [vmem:[%s5 + $0x6c] sm:$0xf]
    %v162 = vld [vmem:[%s5 + $0x70] sm:$0xf]
    %v163 = vld [vmem:[%s5 + $0x74] sm:$0xf]
    %v164 = vld [vmem:[%s5 + $0x78] sm:$0xf]
    %v165 = vld [vmem:[%s5 + $0x7c] sm:$0xf]
    %v166 = vld [vmem:[%s5 + $0x80] sm:$0xf]
    %v167 = vld [vmem:[%s5 + $0x84] sm:$0xf]
    %v168 = vld [vmem:[%s5 + $0x88] sm:$0xf]
    %v169 = vld [vmem:[%s5 + $0x8c] sm:$0xf]
    %v170 = vld [vmem:[%s5 + $0x90] sm:$0xf]
    %v171 = vld [vmem:[%s5 + $0x94] sm:$0xf]
    %v172 = vld [vmem:[%s5 + $0x98] sm:$0xf]
    %v173 = vld [vmem:[%s5 + $0x9c] sm:$0xf]
    %v174 = vld [vmem:[%s5 + $0xa0] sm:$0xf]
    %v175 = vld [vmem:[%s5 + $0xa4] sm:$0xf]
    %v176 = vld [vmem:[%s5 + $0xa8] sm:$0xf]
    %v177 = vld [vmem:[%s5 + $0xac] sm:$0xf]
    %v178 = vld [vmem:[%s5 + $0xb0] sm:$0xf]
    %v179 = vld [vmem:[%s5 + $0xb4] sm:$0xf]
    %v180 = vld [vmem:[%s5 + $0xb8] sm:$0xf]
    %v181 = vld [vmem:[%s5 + $0xbc] sm:$0xf]
    %v182 = vld [vmem:[%s5 + $0xc0] sm:$0xf]
    %v183 = vld [vmem:[%s5 + $0xc4] sm:$0xf]
    %v184 = vld [vmem:[%s5 + $0xc8] sm:$0xf]
    %v185 = vld [vmem:[%s5 + $0xcc] sm:$0xf]
    %v186 = vld [vmem:[%s5 + $0xd0] sm:$0xf]
    %v187 = vld [vmem:[%s5 + $0xd4] sm:$0xf]
    %v188 = vld [vmem:[%s5 + $0xd8] sm:$0xf]
    %v189 = vld [vmem:[%s5 + $0xdc] sm:$0xf]
    %v190 = vld [vmem:[%s5 + $0xe0] sm:$0xf]
    %v191 = vld [vmem:[%s5 + $0xe4] sm:$0xf]
    %v192 = vld [vmem:[%s5 + $0xe8] sm:$0xf]
    %v193 = vld [vmem:[%s5 + $0xec] sm:$0xf]
    %v194 = vld [vmem:[%s5 + $0xf0] sm:$0xf]
    %v195 = vld [vmem:[%s5 + $0xf4] sm:$0xf]
    %v196 = vld [vmem:[%s5 + $0xf8] sm:$0xf]
    %v197 = vld [vmem:[%s5 + $0xfc] sm:$0xf]
    %v198 = vld [vmem:[%s5 + $0x100] sm:$0xf]
    %v199 = vld [vmem:[%s5 + $0x104] sm:$0xf]
    %v200 = vld [vmem:[%s5 + $0x108] sm:$0xf]
    %v201 = vld [vmem:[%s5 + $0x10c] sm:$0xf]
    %v202 = vld [vmem:[%s5 + $0x110] sm:$0xf]
    %v203 = vld [vmem:[%s5 + $0x114] sm:$0xf]
    %v204 = vld [vmem:[%s5 + $0x118] sm:$0xf]
    %v205 = vld [vmem:[%s5 + $0x11c] sm:$0xf]
    %v206 = vld [vmem:[%s5 + $0x120] sm:$0xf]
    %v207 = vld [vmem:[%s5 + $0x124] sm:$0xf]
    %v208 = vld [vmem:[%s5 + $0x128] sm:$0xf]
    %v209 = vld [vmem:[%s5 + $0x12c] sm:$0xf]
    %v210 = vld [vmem:[%s5 + $0x130] sm:$0xf]
    %v211 = vld [vmem:[%s5 + $0x134] sm:$0xf]
    %v212 = vld [vmem:[%s5 + $0x138] sm:$0xf]
    %v213 = vld [vmem:[%s5 + $0x13c] sm:$0xf]
    %v214 = vld [vmem:[%s5 + $0x140] sm:$0xf]
    %v215 = vld [vmem:[%s5 + $0x144] sm:$0xf]
    %v216 = vld [vmem:[%s5 + $0x148] sm:$0xf]
    %v217 = vld [vmem:[%s5 + $0x14c] sm:$0xf]
    %v218 = vld [vmem:[%s5 + $0x150] sm:$0xf]
    %v219 = vld [vmem:[%s5 + $0x154] sm:$0xf]
    %v220 = vld [vmem:[%s5 + $0x158] sm:$0xf]
    %v221 = vld [vmem:[%s5 + $0x15c] sm:$0xf]
    %v222 = vld [vmem:[%s5 + $0x160] sm:$0xf]
    %v223 = vld [vmem:[%s5 + $0x164] sm:$0xf]
    %v224 = vld [vmem:[%s5 + $0x168] sm:$0xf]
    %v225 = vld [vmem:[%s5 + $0x16c] sm:$0xf]
    %v226 = vld [vmem:[%s5 + $0x170] sm:$0xf]
    %v227 = vld [vmem:[%s5 + $0x174] sm:$0xf]
    %v228 = vld [vmem:[%s5 + $0x178] sm:$0xf]
    %v229 = vld [vmem:[%s5 + $0x17c] sm:$0xf]
    %v230 = vld [vmem:[%s5 + $0x180] sm:$0xf]
    %v231 = vld [vmem:[%s5 + $0x184] sm:$0xf]
    %v232 = vld [vmem:[%s5 + $0x188] sm:$0xf]
    %v233 = vld [vmem:[%s5 + $0x18c] sm:$0xf]
    %v234 = vld [vmem:[%s5 + $0x190] sm:$0xf]
    %v235 = vld [vmem:[%s5 + $0x194] sm:$0xf]
    %v236 = vld [vmem:[%s5 + $0x198] sm:$0xf]
    %v237 = vld [vmem:[%s5 + $0x19c] sm:$0xf]
    %v238 = vld [vmem:[%s5 + $0x1a0] sm:$0xf]
    %v239 = vld [vmem:[%s5 + $0x1a4] sm:$0xf]
    %v240 = vld [vmem:[%s5 + $0x1a8] sm:$0xf]
    %v241 = vld [vmem:[%s5 + $0x1ac] sm:$0xf]
    %v242 = vld [vmem:[%s5 + $0x1b0] sm:$0xf]
    %v243 = vld [vmem:[%s5 + $0x1b4] sm:$0xf]
    %v244 = vld [vmem:[%s5 + $0x1b8] sm:$0xf]
    %v245 = vld [vmem:[%s5 + $0x1bc] sm:$0xf]
    %v246 = vld [vmem:[%s5 + $0x1c0] sm:$0xf]
    %v247 = vld [vmem:[%s5 + $0x1c4] sm:$0xf]
    %v248 = vld [vmem:[%s5 + $0x1c8] sm:$0xf]
    %v249 = vld [vmem:[%s5 + $0x1cc] sm:$0xf]
    %v250 = vld [vmem:[%s5 + $0x1d0] sm:$0xf]
    %v251 = vld [vmem:[%s5 + $0x1d4] sm:$0xf]
    %v252 = vld [vmem:[%s5 + $0x1d8] sm:$0xf]
    %v253 = vld [vmem:[%s5 + $0x1dc] sm:$0xf]
    %v254 = vld [vmem:[%s5 + $0x1e0] sm:$0xf]
    %v255 = vld [vmem:[%s5 + $0x1e4] sm:$0xf]
    %v256 = vld [vmem:[%s5 + $0x1e8] sm:$0xf]
    %v257 = vld [vmem:[%s5 + $0x1ec] sm:$0xf]
    %v258 = vld [vmem:[%s5 + $0x1f0] sm:$0xf]
    %v259 = vld [vmem:[%s5 + $0x1f4] sm:$0xf]
    %v260 = vld [vmem:[%s5 + $0x1f8] sm:$0xf]
    %v261 = vld [vmem:[%s5 + $0x1fc] sm:$0xf]
    %v262 = vld [vmem:[%s5 + $0x200] sm:$0xf]
    %v263 = vld [vmem:[%s5 + $0x204] sm:$0xf]
    %v264 = vld [vmem:[%s5 + $0x208] sm:$0xf]
    %v265 = vld [vmem:[%s5 + $0x20c] sm:$0xf]
    %v266 = vld [vmem:[%s5 + $0x210] sm:$0xf]
    %v267 = vld [vmem:[%s5 + $0x214] sm:$0xf]
    %v268 = vld [vmem:[%s5 + $0x218] sm:$0xf]
    %v269 = vld [vmem:[%s5 + $0x21c] sm:$0xf]
    %v270 = vld [vmem:[%s5 + $0x220] sm:$0xf]
    %v271 = vld [vmem:[%s5 + $0x224] sm:$0xf]
    %v272 = vld [vmem:[%s5 + $0x228] sm:$0xf]
    %v273 = vld [vmem:[%s5 + $0x22c] sm:$0xf]
    %v274 = vld [vmem:[%s5 + $0x230] sm:$0xf]
    %v275 = vld [vmem:[%s5 + $0x234] sm:$0xf]
    %v276 = vld [vmem:[%s5 + $0x238] sm:$0xf]
    %v277 = vld [vmem:[%s5 + $0x23c] sm:$0xf]
    %v422 = vunpack.c.l.b16 %v134
    %v423 = vunpack.c.l.b16 %v135
    %v424 = vunpack.c.l.b16 %v136
    %v425 = vunpack.c.l.b16 %v137
    %v426 = vunpack.c.l.b16 %v138
    %v427 = vunpack.c.l.b16 %v139
    %v428 = vunpack.c.l.b16 %v140
    %v429 = vunpack.c.l.b16 %v141
    %v430 = vunpack.c.l.b16 %v142
    %v431 = vunpack.c.l.b16 %v143
    %v432 = vunpack.c.l.b16 %v144
    %v433 = vunpack.c.l.b16 %v145
    %v434 = vunpack.c.l.b16 %v146
    %v435 = vunpack.c.l.b16 %v147
    %v436 = vunpack.c.l.b16 %v148
    %v437 = vunpack.c.l.b16 %v149
    %v438 = vunpack.c.l.b16 %v150
    %v439 = vunpack.c.l.b16 %v151
    %v440 = vunpack.c.l.b16 %v152
    %v441 = vunpack.c.l.b16 %v153
    %v442 = vunpack.c.l.b16 %v154
    %v443 = vunpack.c.l.b16 %v155
    %v444 = vunpack.c.l.b16 %v156
    %v445 = vunpack.c.l.b16 %v157
    %v446 = vunpack.c.l.b16 %v158
    %v447 = vunpack.c.l.b16 %v159
    %v448 = vunpack.c.l.b16 %v160
    %v449 = vunpack.c.l.b16 %v161
    %v450 = vunpack.c.l.b16 %v162
    %v451 = vunpack.c.l.b16 %v163
    %v452 = vunpack.c.l.b16 %v164
    %v453 = vunpack.c.l.b16 %v165
    %v454 = vunpack.c.l.b16 %v166
    %v455 = vunpack.c.l.b16 %v167
    %v456 = vunpack.c.l.b16 %v168
    %v457 = vunpack.c.l.b16 %v169
    %v458 = vunpack.c.l.b16 %v170
    %v459 = vunpack.c.l.b16 %v171
    %v460 = vunpack.c.l.b16 %v172
    %v461 = vunpack.c.l.b16 %v173
    %v462 = vunpack.c.l.b16 %v174
    %v463 = vunpack.c.l.b16 %v175
    %v464 = vunpack.c.l.b16 %v176
    %v465 = vunpack.c.l.b16 %v177
    %v466 = vunpack.c.l.b16 %v178
    %v467 = vunpack.c.l.b16 %v179
    %v468 = vunpack.c.l.b16 %v180
    %v469 = vunpack.c.l.b16 %v181
    %v470 = vunpack.c.l.b16 %v182
    %v471 = vunpack.c.l.b16 %v183
    %v472 = vunpack.c.l.b16 %v184
    %v473 = vunpack.c.l.b16 %v185
    %v474 = vunpack.c.l.b16 %v186
    %v475 = vunpack.c.l.b16 %v187
    %v476 = vunpack.c.l.b16 %v188
    %v477 = vunpack.c.l.b16 %v189
    %v478 = vunpack.c.l.b16 %v190
    %v479 = vunpack.c.l.b16 %v191
    %v480 = vunpack.c.l.b16 %v192
    %v481 = vunpack.c.l.b16 %v193
    %v482 = vunpack.c.l.b16 %v194
    %v483 = vunpack.c.l.b16 %v195
    %v484 = vunpack.c.l.b16 %v196
    %v485 = vunpack.c.l.b16 %v197
    %v486 = vunpack.c.l.b16 %v198
    %v487 = vunpack.c.l.b16 %v199
    %v488 = vunpack.c.l.b16 %v200
    %v489 = vunpack.c.l.b16 %v201
    %v490 = vunpack.c.l.b16 %v202
    %v491 = vunpack.c.l.b16 %v203
    %v492 = vunpack.c.l.b16 %v204
    %v493 = vunpack.c.l.b16 %v205
    %v494 = vunpack.c.l.b16 %v206
    %v495 = vunpack.c.l.b16 %v207
    %v496 = vunpack.c.l.b16 %v208
    %v497 = vunpack.c.l.b16 %v209
    %v498 = vunpack.c.l.b16 %v210
    %v499 = vunpack.c.l.b16 %v211
    %v500 = vunpack.c.l.b16 %v212
    %v501 = vunpack.c.l.b16 %v213
    %v502 = vunpack.c.l.b16 %v214
    %v503 = vunpack.c.l.b16 %v215
    %v504 = vunpack.c.l.b16 %v216
    %v505 = vunpack.c.l.b16 %v217
    %v506 = vunpack.c.l.b16 %v218
    %v507 = vunpack.c.l.b16 %v219
    %v508 = vunpack.c.l.b16 %v220
    %v509 = vunpack.c.l.b16 %v221
    %v510 = vunpack.c.l.b16 %v222
    %v511 = vunpack.c.l.b16 %v223
    %v512 = vunpack.c.l.b16 %v224
    %v513 = vunpack.c.l.b16 %v225
    %v514 = vunpack.c.l.b16 %v226
    %v515 = vunpack.c.l.b16 %v227
    %v516 = vunpack.c.l.b16 %v228
    %v517 = vunpack.c.l.b16 %v229
    %v518 = vunpack.c.l.b16 %v230
    %v519 = vunpack.c.l.b16 %v231
    %v520 = vunpack.c.l.b16 %v232
    %v521 = vunpack.c.l.b16 %v233
    %v522 = vunpack.c.l.b16 %v234
    %v523 = vunpack.c.l.b16 %v235
    %v524 = vunpack.c.l.b16 %v236
    %v525 = vunpack.c.l.b16 %v237
    %v526 = vunpack.c.l.b16 %v238
    %v527 = vunpack.c.l.b16 %v239
    %v528 = vunpack.c.l.b16 %v240
    %v529 = vunpack.c.l.b16 %v241
    %v530 = vunpack.c.l.b16 %v242
    %v531 = vunpack.c.l.b16 %v243
    %v532 = vunpack.c.l.b16 %v244
    %v533 = vunpack.c.l.b16 %v245
    %v534 = vunpack.c.l.b16 %v246
    %v535 = vunpack.c.l.b16 %v247
    %v536 = vunpack.c.l.b16 %v248
    %v537 = vunpack.c.l.b16 %v249
    %v538 = vunpack.c.l.b16 %v250
    %v539 = vunpack.c.l.b16 %v251
    %v540 = vunpack.c.l.b16 %v252
    %v541 = vunpack.c.l.b16 %v253
    %v542 = vunpack.c.l.b16 %v254
    %v543 = vunpack.c.l.b16 %v255
    %v544 = vunpack.c.l.b16 %v256
    %v545 = vunpack.c.l.b16 %v257
    %v546 = vunpack.c.l.b16 %v258
    %v547 = vunpack.c.l.b16 %v259
    %v548 = vunpack.c.l.b16 %v260
    %v549 = vunpack.c.l.b16 %v261
    %v550 = vunpack.c.l.b16 %v262
    %v551 = vunpack.c.l.b16 %v263
    %v552 = vunpack.c.l.b16 %v264
    %v553 = vunpack.c.l.b16 %v265
    %v554 = vunpack.c.l.b16 %v266
    %v555 = vunpack.c.l.b16 %v267
    %v556 = vunpack.c.l.b16 %v268
    %v557 = vunpack.c.l.b16 %v269
    %v558 = vunpack.c.l.b16 %v270
    %v559 = vunpack.c.l.b16 %v271
    %v560 = vunpack.c.l.b16 %v272
    %v561 = vunpack.c.l.b16 %v273
    %v562 = vunpack.c.l.b16 %v274
    %v563 = vunpack.c.l.b16 %v275
    %v564 = vunpack.c.l.b16 %v276
    %v565 = vunpack.c.l.b16 %v277
    %v566 = vpack.c.b16 %v423, %v422
    %v567 = vpack.c.b16 %v425, %v424
    %v568 = vpack.c.b16 %v427, %v426
    %v569 = vpack.c.b16 %v429, %v428
    %v570 = vpack.c.b16 %v431, %v430
    %v571 = vpack.c.b16 %v433, %v432
    %v572 = vpack.c.b16 %v435, %v434
    %v573 = vpack.c.b16 %v437, %v436
    %v574 = vpack.c.b16 %v439, %v438
    %v575 = vpack.c.b16 %v441, %v440
    %v576 = vpack.c.b16 %v443, %v442
    %v577 = vpack.c.b16 %v445, %v444
    %v578 = vpack.c.b16 %v447, %v446
    %v579 = vpack.c.b16 %v449, %v448
    %v580 = vpack.c.b16 %v451, %v450
    %v581 = vpack.c.b16 %v453, %v452
    %v582 = vpack.c.b16 %v455, %v454
    %v583 = vpack.c.b16 %v457, %v456
    %v584 = vpack.c.b16 %v459, %v458
    %v585 = vpack.c.b16 %v461, %v460
    %v586 = vpack.c.b16 %v463, %v462
    %v587 = vpack.c.b16 %v465, %v464
    %v588 = vpack.c.b16 %v467, %v466
    %v589 = vpack.c.b16 %v469, %v468
    %v590 = vpack.c.b16 %v471, %v470
    %v591 = vpack.c.b16 %v473, %v472
    %v592 = vpack.c.b16 %v475, %v474
    %v593 = vpack.c.b16 %v477, %v476
    %v594 = vpack.c.b16 %v479, %v478
    %v595 = vpack.c.b16 %v481, %v480
    %v596 = vpack.c.b16 %v483, %v482
    %v597 = vpack.c.b16 %v485, %v484
    %v598 = vpack.c.b16 %v487, %v486
    %v599 = vpack.c.b16 %v489, %v488
    %v600 = vpack.c.b16 %v491, %v490
    %v601 = vpack.c.b16 %v493, %v492
    %v602 = vpack.c.b16 %v495, %v494
    %v603 = vpack.c.b16 %v497, %v496
    %v604 = vpack.c.b16 %v499, %v498
    %v605 = vpack.c.b16 %v501, %v500
    %v606 = vpack.c.b16 %v503, %v502
    %v607 = vpack.c.b16 %v505, %v504
    %v608 = vpack.c.b16 %v507, %v506
    %v609 = vpack.c.b16 %v509, %v508
    %v610 = vpack.c.b16 %v511, %v510
    %v611 = vpack.c.b16 %v513, %v512
    %v612 = vpack.c.b16 %v515, %v514
    %v613 = vpack.c.b16 %v517, %v516
    %v614 = vpack.c.b16 %v519, %v518
    %v615 = vpack.c.b16 %v521, %v520
    %v616 = vpack.c.b16 %v523, %v522
    %v617 = vpack.c.b16 %v525, %v524
    %v618 = vpack.c.b16 %v527, %v526
    %v619 = vpack.c.b16 %v529, %v528
    %v620 = vpack.c.b16 %v531, %v530
    %v621 = vpack.c.b16 %v533, %v532
    %v622 = vpack.c.b16 %v535, %v534
    %v623 = vpack.c.b16 %v537, %v536
    %v624 = vpack.c.b16 %v539, %v538
    %v625 = vpack.c.b16 %v541, %v540
    %v626 = vpack.c.b16 %v543, %v542
    %v627 = vpack.c.b16 %v545, %v544
    %v628 = vpack.c.b16 %v547, %v546
    %v629 = vpack.c.b16 %v549, %v548
    %v630 = vpack.c.b16 %v551, %v550
    %v631 = vpack.c.b16 %v553, %v552
    %v632 = vpack.c.b16 %v555, %v554
    %v633 = vpack.c.b16 %v557, %v556
    %v634 = vpack.c.b16 %v559, %v558
    %v635 = vpack.c.b16 %v561, %v560
    %v636 = vpack.c.b16 %v563, %v562
    %v637 = vpack.c.b16 %v565, %v564
    %710 = vmatprep.subr.bf16.mxu0 0
    %711 = vmatpush1.bf16.msra.mxu0 %v566
    %712 = vmatprep.subr.bf16.mxu0 0
    %713 = vmatpush1.bf16.msra.mxu0 %v567
    %714 = vmatprep.subr.bf16.mxu0 0
    %715 = vmatpush1.bf16.msra.mxu0 %v568
    %716 = vmatprep.subr.bf16.mxu0 0
    %717 = vmatpush1.bf16.msra.mxu0 %v569
    %718 = vmatprep.subr.bf16.mxu0 0
    %719 = vmatpush1.bf16.msra.mxu0 %v570
    %720 = vmatprep.subr.bf16.mxu0 0
    %721 = vmatpush1.bf16.msra.mxu0 %v571
    %722 = vmatprep.subr.bf16.mxu0 0
    %723 = vmatpush1.bf16.msra.mxu0 %v572
    %724 = vmatprep.subr.bf16.mxu0 0
    %725 = vmatpush1.bf16.msra.mxu0 %v573
    %726 = vmatprep.subr.bf16.mxu0 0
    %727 = vmatpush1.bf16.msra.mxu0 %v574
    %728 = vmatprep.subr.bf16.mxu0 0
    %729 = vmatpush1.bf16.msra.mxu0 %v575
    %730 = vmatprep.subr.bf16.mxu0 0
    %731 = vmatpush1.bf16.msra.mxu0 %v576
    %732 = vmatprep.subr.bf16.mxu0 0
    %733 = vmatpush1.bf16.msra.mxu0 %v577
    %734 = vmatprep.subr.bf16.mxu0 0
    %735 = vmatpush1.bf16.msra.mxu0 %v578
    %736 = vmatprep.subr.bf16.mxu0 0
    %737 = vmatpush1.bf16.msra.mxu0 %v579
    %738 = vmatprep.subr.bf16.mxu0 0
    %739 = vmatpush1.bf16.msra.mxu0 %v580
    %740 = vmatprep.subr.bf16.mxu0 0
    %741 = vmatpush1.bf16.msra.mxu0 %v581
    %742 = vmatprep.mubr.bf16.mxu0 %v126
    %743 = vmatmul.mubr.bf16.gmra.mrb[0].mxu0 %v125
    %v744 = vpop.f32.mrb[0].mxu0
    %v745 = vadd.f32 0.0, %v744
    %v746 = vpop.f32.mrb[0].mxu0
    %v747 = vpop.f32.mrb[0].mxu0
    %v748 = vpop.f32.mrb[0].mxu0
    %749 = vdwg.mxu0
    %750 = vmatprep.subr.bf16.mxu0 0
    %751 = vmatpush1.bf16.msra.mxu0 %v582
    %752 = vmatprep.subr.bf16.mxu0 0
    %753 = vmatpush1.bf16.msra.mxu0 %v583
    %754 = vmatprep.subr.bf16.mxu0 0
    %755 = vmatpush1.bf16.msra.mxu0 %v584
    %756 = vmatprep.subr.bf16.mxu0 0
    %757 = vmatpush1.bf16.msra.mxu0 %v585
    %758 = vmatprep.subr.bf16.mxu0 0
    %759 = vmatpush1.bf16.msra.mxu0 %v586
    %760 = vmatprep.subr.bf16.mxu0 0
    %761 = vmatpush1.bf16.msra.mxu0 %v587
    %762 = vmatprep.subr.bf16.mxu0 0
    %763 = vmatpush1.bf16.msra.mxu0 %v588
    %764 = vmatprep.subr.bf16.mxu0 0
    %765 = vmatpush1.bf16.msra.mxu0 %v589
    %766 = vmatprep.subr.bf16.mxu0 0
    %767 = vmatpush1.bf16.msra.mxu0 %v590
    %768 = vmatprep.subr.bf16.mxu0 0
    %769 = vmatpush1.bf16.msra.mxu0 %v591
    %770 = vmatprep.subr.bf16.mxu0 0
    %771 = vmatpush1.bf16.msra.mxu0 %v592
    %772 = vmatprep.subr.bf16.mxu0 0
    %773 = vmatpush1.bf16.msra.mxu0 %v593
    %774 = vmatprep.subr.bf16.mxu0 0
    %775 = vmatpush1.bf16.msra.mxu0 %v594
    %776 = vmatprep.subr.bf16.mxu0 0
    %777 = vmatpush1.bf16.msra.mxu0 %v595
    %778 = vmatprep.subr.bf16.mxu0 0
    %779 = vmatpush1.bf16.msra.mxu0 %v596
    %780 = vmatprep.subr.bf16.mxu0 0
    %781 = vmatpush1.bf16.msra.mxu0 %v597
    %782 = vmatprep.mubr.bf16.mxu0 %v128
    %783 = vmatmul.mubr.bf16.gmra.mrb[0].mxu0 %v127
    %v784 = vpop.f32.mrb[0].mxu0
    %v785 = vadd.f32 %v745, %v784
    %v786 = vpop.f32.mrb[0].mxu0
    %v787 = vpop.f32.mrb[0].mxu0
    %v788 = vpop.f32.mrb[0].mxu0
    %789 = vdwg.mxu0
    %790 = vmatprep.subr.bf16.mxu0 0
    %791 = vmatpush1.bf16.msra.mxu0 %v598
    %792 = vmatprep.subr.bf16.mxu0 0
    %793 = vmatpush1.bf16.msra.mxu0 %v599
    %794 = vmatprep.subr.bf16.mxu0 0
    %795 = vmatpush1.bf16.msra.mxu0 %v600
    %796 = vmatprep.subr.bf16.mxu0 0
    %797 = vmatpush1.bf16.msra.mxu0 %v601
    %798 = vmatprep.subr.bf16.mxu0 0
    %799 = vmatpush1.bf16.msra.mxu0 %v602
    %800 = vmatprep.subr.bf16.mxu0 0
    %801 = vmatpush1.bf16.msra.mxu0 %v603
    %802 = vmatprep.subr.bf16.mxu0 0
    %803 = vmatpush1.bf16.msra.mxu0 %v604
    %804 = vmatprep.subr.bf16.mxu0 0
    %805 = vmatpush1.bf16.msra.mxu0 %v605
    %806 = vmatprep.subr.bf16.mxu0 0
    %807 = vmatpush1.bf16.msra.mxu0 %v606
    %808 = vmatprep.subr.bf16.mxu0 0
    %809 = vmatpush1.bf16.msra.mxu0 %v607
    %810 = vmatprep.subr.bf16.mxu0 0
    %811 = vmatpush1.bf16.msra.mxu0 %v608
    %812 = vmatprep.subr.bf16.mxu0 0
    %813 = vmatpush1.bf16.msra.mxu0 %v609
    %814 = vmatprep.subr.bf16.mxu0 0
    %815 = vmatpush1.bf16.msra.mxu0 %v610
    %816 = vmatprep.subr.bf16.mxu0 0
    %817 = vmatpush1.bf16.msra.mxu0 %v611
    %818 = vmatprep.subr.bf16.mxu0 0
    %819 = vmatpush1.bf16.msra.mxu0 %v612
    %820 = vmatprep.subr.bf16.mxu0 0
    %821 = vmatpush1.bf16.msra.mxu0 %v613
    %822 = vmatprep.mubr.bf16.mxu0 %v130
    %823 = vmatmul.mubr.bf16.gmra.mrb[0].mxu0 %v129
    %v824 = vpop.f32.mrb[0].mxu0
    %v825 = vadd.f32 %v785, %v824
    %v826 = vpop.f32.mrb[0].mxu0
    %v827 = vpop.f32.mrb[0].mxu0
    %v828 = vpop.f32.mrb[0].mxu0
    %829 = vdwg.mxu0
    %830 = vmatprep.subr.bf16.mxu0 0
    %831 = vmatpush1.bf16.msra.mxu0 %v614
    %832 = vmatprep.subr.bf16.mxu0 0
    %833 = vmatpush1.bf16.msra.mxu0 %v615
    %834 = vmatprep.subr.bf16.mxu0 0
    %835 = vmatpush1.bf16.msra.mxu0 %v616
    %836 = vmatprep.subr.bf16.mxu0 0
    %837 = vmatpush1.bf16.msra.mxu0 %v617
    %838 = vmatprep.subr.bf16.mxu0 0
    %839 = vmatpush1.bf16.msra.mxu0 %v618
    %840 = vmatprep.subr.bf16.mxu0 0
    %841 = vmatpush1.bf16.msra.mxu0 %v619
    %842 = vmatprep.subr.bf16.mxu0 0
    %843 = vmatpush1.bf16.msra.mxu0 %v620
    %844 = vmatprep.subr.bf16.mxu0 0
    %845 = vmatpush1.bf16.msra.mxu0 %v621
    %846 = vmatprep.subr.bf16.mxu0 0
    %847 = vmatpush1.bf16.msra.mxu0 %v622
    %848 = vmatprep.subr.bf16.mxu0 0
    %849 = vmatpush1.bf16.msra.mxu0 %v623
    %850 = vmatprep.subr.bf16.mxu0 0
    %851 = vmatpush1.bf16.msra.mxu0 %v624
    %852 = vmatprep.subr.bf16.mxu0 0
    %853 = vmatpush1.bf16.msra.mxu0 %v625
    %854 = vmatprep.subr.bf16.mxu0 0
    %855 = vmatpush1.bf16.msra.mxu0 %v626
    %856 = vmatprep.subr.bf16.mxu0 0
    %857 = vmatpush1.bf16.msra.mxu0 %v627
    %858 = vmatprep.subr.bf16.mxu0 0
    %859 = vmatpush1.bf16.msra.mxu0 %v628
    %860 = vmatprep.subr.bf16.mxu0 0
    %861 = vmatpush1.bf16.msra.mxu0 %v629
    %862 = vmatprep.mubr.bf16.mxu0 %v132
    %863 = vmatmul.mubr.bf16.gmra.mrb[0].mxu0 %v131
    %v864 = vpop.f32.mrb[0].mxu0
    %v865 = vadd.f32 %v825, %v864
    %v866 = vpop.f32.mrb[0].mxu0
    %v867 = vpop.f32.mrb[0].mxu0
    %v868 = vpop.f32.mrb[0].mxu0
    %869 = vdwg.mxu0
    %870 = vmatprep.subr.bf16.mxu0 0
    %871 = vmatpush1.bf16.msra.mxu0 %v630
    %872 = vmatprep.subr.bf16.mxu0 0
    %873 = vmatpush1.bf16.msra.mxu0 %v631
    %874 = vmatprep.subr.bf16.mxu0 0
    %875 = vmatpush1.bf16.msra.mxu0 %v632
    %876 = vmatprep.subr.bf16.mxu0 0
    %877 = vmatpush1.bf16.msra.mxu0 %v633
    %878 = vmatprep.subr.bf16.mxu0 0
    %879 = vmatpush1.bf16.msra.mxu0 %v634
    %880 = vmatprep.subr.bf16.mxu0 0
    %881 = vmatpush1.bf16.msra.mxu0 %v635
    %882 = vmatprep.subr.bf16.mxu0 0
    %883 = vmatpush1.bf16.msra.mxu0 %v636
    %884 = vmatprep.subr.bf16.mxu0 0
    %885 = vmatpush1.bf16.msra.mxu0 %v637
    %886 = vmatprep.subr.bf16.mxu0 0
    %887 = vmatpush1.bf16.msra.mxu0 0
    %888 = vmatprep.subr.bf16.mxu0 0
    %889 = vmatpush1.bf16.msra.mxu0 0
    %890 = vmatprep.subr.bf16.mxu0 0
    %891 = vmatpush1.bf16.msra.mxu0 0
    %892 = vmatprep.subr.bf16.mxu0 0
    %893 = vmatpush1.bf16.msra.mxu0 0
    %894 = vmatprep.subr.bf16.mxu0 0
    %895 = vmatpush1.bf16.msra.mxu0 0
    %896 = vmatprep.subr.bf16.mxu0 0
    %897 = vmatpush1.bf16.msra.mxu0 0
    %898 = vmatprep.subr.bf16.mxu0 0
    %899 = vmatpush1.bf16.msra.mxu0 0
    %900 = vmatprep.subr.bf16.mxu0 0
    %901 = vmatpush1.bf16.msra.mxu0 0
    %902 = vmatprep.mubr.bf16.mxu0 0
    %903 = vmatmul.mubr.bf16.gmra.mrb[0].mxu0 %v133
    %v904 = vpop.f32.mrb[0].mxu0
    %v905 = vadd.f32 %v865, %v904
    %v906 = vpop.f32.mrb[0].mxu0
    %v907 = vpop.f32.mrb[0].mxu0
    %v908 = vpop.f32.mrb[0].mxu0
    %909 = vdwg.mxu0
    %v910 = vxor.u32 %v905, 2147483648
    %v911 = vmul.f32 %v910, 1.442695
    %v912 = vpow.pop %v911
    %v913 = vadd.f32 %v912, 1.0
    %v914 = vrcp.pop %v913
    %v915 = vmul.f32 1.0, %v914
    %v916 = vld [vmem:[%s3] sm:$0xff]
    %v917 = vmul.f32 %v915, %v916
    %v918 = vld [vmem:[%s4] sm:$0xff]
    %920 = vrot.lane.b32.xlu0 %v918, 32
    %v921 = vpop.permute.xlu0 %920
    %vm923 = vcmask 261120
    %v924 = vsel %vm923, %v917, %v921
    %vm925 = vcmask 531456
    %v926 = vsel %vm925, %v924, 0.0
    %v927 = vmul.f32 %v87, %v926
    %v928 = vmul.f32 %v92, %v926
    %v929 = vmul.f32 %v97, %v926
    %v930 = vmul.f32 %v102, %v926
    %v931 = vmul.f32 %v107, %v926
    %v932 = vmul.f32 %v112, %v926
    %v933 = vmul.f32 %v117, %v926
    %v934 = vmul.f32 %v122, %v926
    %v935 = vpack.c.bf16 %v927, %v927
    %v936 = vpack.c.bf16 %v928, %v928
    %v937 = vpack.c.bf16 %v929, %v929
    %v938 = vpack.c.bf16 %v930, %v930
    %v939 = vpack.c.bf16 %v931, %v931
    %v940 = vpack.c.bf16 %v932, %v932
    %v941 = vpack.c.bf16 %v933, %v933
    %v942 = vpack.c.bf16 %v934, %v934
    %v943 = vld [vmem:[%s6] sm:$0xf]
    %v944 = vld [vmem:[%s6 + $0x4] sm:$0xf]
    %v945 = vld [vmem:[%s6 + $0x8] sm:$0xf]
    %v946 = vld [vmem:[%s6 + $0xc] sm:$0xf]
    %v947 = vld [vmem:[%s6 + $0x10] sm:$0xf]
    %v948 = vld [vmem:[%s6 + $0x14] sm:$0xf]
    %v949 = vld [vmem:[%s6 + $0x18] sm:$0xf]
    %v950 = vld [vmem:[%s6 + $0x1c] sm:$0xf]
    %v951 = vld [vmem:[%s6 + $0x20] sm:$0xf]
    %v952 = vld [vmem:[%s6 + $0x24] sm:$0xf]
    %v953 = vld [vmem:[%s6 + $0x28] sm:$0xf]
    %v954 = vld [vmem:[%s6 + $0x2c] sm:$0xf]
    %v955 = vld [vmem:[%s6 + $0x30] sm:$0xf]
    %v956 = vld [vmem:[%s6 + $0x34] sm:$0xf]
    %v957 = vld [vmem:[%s6 + $0x38] sm:$0xf]
    %v958 = vld [vmem:[%s6 + $0x3c] sm:$0xf]
    %v959 = vld [vmem:[%s6 + $0x40] sm:$0xf]
    %v960 = vld [vmem:[%s6 + $0x44] sm:$0xf]
    %v961 = vld [vmem:[%s6 + $0x48] sm:$0xf]
    %v962 = vld [vmem:[%s6 + $0x4c] sm:$0xf]
    %v963 = vld [vmem:[%s6 + $0x50] sm:$0xf]
    %v964 = vld [vmem:[%s6 + $0x54] sm:$0xf]
    %v965 = vld [vmem:[%s6 + $0x58] sm:$0xf]
    %v966 = vld [vmem:[%s6 + $0x5c] sm:$0xf]
    %v967 = vld [vmem:[%s6 + $0x60] sm:$0xf]
    %v968 = vld [vmem:[%s6 + $0x64] sm:$0xf]
    %v969 = vld [vmem:[%s6 + $0x68] sm:$0xf]
    %v970 = vld [vmem:[%s6 + $0x6c] sm:$0xf]
    %v971 = vld [vmem:[%s6 + $0x70] sm:$0xf]
    %v972 = vld [vmem:[%s6 + $0x74] sm:$0xf]
    %v973 = vld [vmem:[%s6 + $0x78] sm:$0xf]
    %v974 = vld [vmem:[%s6 + $0x7c] sm:$0xf]
    %v975 = vld [vmem:[%s6 + $0x80] sm:$0xf]
    %v976 = vld [vmem:[%s6 + $0x84] sm:$0xf]
    %v977 = vld [vmem:[%s6 + $0x88] sm:$0xf]
    %v978 = vld [vmem:[%s6 + $0x8c] sm:$0xf]
    %v979 = vld [vmem:[%s6 + $0x90] sm:$0xf]
    %v980 = vld [vmem:[%s6 + $0x94] sm:$0xf]
    %v981 = vld [vmem:[%s6 + $0x98] sm:$0xf]
    %v982 = vld [vmem:[%s6 + $0x9c] sm:$0xf]
    %v983 = vld [vmem:[%s6 + $0xa0] sm:$0xf]
    %v984 = vld [vmem:[%s6 + $0xa4] sm:$0xf]
    %v985 = vld [vmem:[%s6 + $0xa8] sm:$0xf]
    %v986 = vld [vmem:[%s6 + $0xac] sm:$0xf]
    %v987 = vld [vmem:[%s6 + $0xb0] sm:$0xf]
    %v988 = vld [vmem:[%s6 + $0xb4] sm:$0xf]
    %v989 = vld [vmem:[%s6 + $0xb8] sm:$0xf]
    %v990 = vld [vmem:[%s6 + $0xbc] sm:$0xf]
    %v991 = vld [vmem:[%s6 + $0xc0] sm:$0xf]
    %v992 = vld [vmem:[%s6 + $0xc4] sm:$0xf]
    %v993 = vld [vmem:[%s6 + $0xc8] sm:$0xf]
    %v994 = vld [vmem:[%s6 + $0xcc] sm:$0xf]
    %v995 = vld [vmem:[%s6 + $0xd0] sm:$0xf]
    %v996 = vld [vmem:[%s6 + $0xd4] sm:$0xf]
    %v997 = vld [vmem:[%s6 + $0xd8] sm:$0xf]
    %v998 = vld [vmem:[%s6 + $0xdc] sm:$0xf]
    %v999 = vld [vmem:[%s6 + $0xe0] sm:$0xf]
    %v1000 = vld [vmem:[%s6 + $0xe4] sm:$0xf]
    %v1001 = vld [vmem:[%s6 + $0xe8] sm:$0xf]
    %v1002 = vld [vmem:[%s6 + $0xec] sm:$0xf]
    %v1003 = vld [vmem:[%s6 + $0xf0] sm:$0xf]
    %v1004 = vld [vmem:[%s6 + $0xf4] sm:$0xf]
    %v1005 = vld [vmem:[%s6 + $0xf8] sm:$0xf]
    %v1006 = vld [vmem:[%s6 + $0xfc] sm:$0xf]
    %v1007 = vld [vmem:[%s6 + $0x100] sm:$0xf]
    %v1008 = vld [vmem:[%s6 + $0x104] sm:$0xf]
    %v1009 = vld [vmem:[%s6 + $0x108] sm:$0xf]
    %v1010 = vld [vmem:[%s6 + $0x10c] sm:$0xf]
    %v1011 = vld [vmem:[%s6 + $0x110] sm:$0xf]
    %v1012 = vld [vmem:[%s6 + $0x114] sm:$0xf]
    %v1013 = vld [vmem:[%s6 + $0x118] sm:$0xf]
    %v1014 = vld [vmem:[%s6 + $0x11c] sm:$0xf]
    %v1015 = vld [vmem:[%s6 + $0x120] sm:$0xf]
    %v1016 = vld [vmem:[%s6 + $0x124] sm:$0xf]
    %v1017 = vld [vmem:[%s6 + $0x128] sm:$0xf]
    %v1018 = vld [vmem:[%s6 + $0x12c] sm:$0xf]
    %v1019 = vld [vmem:[%s6 + $0x130] sm:$0xf]
    %v1020 = vld [vmem:[%s6 + $0x134] sm:$0xf]
    %v1021 = vld [vmem:[%s6 + $0x138] sm:$0xf]
    %v1022 = vld [vmem:[%s6 + $0x13c] sm:$0xf]
    %v1023 = vld [vmem:[%s6 + $0x140] sm:$0xf]
    %v1024 = vld [vmem:[%s6 + $0x144] sm:$0xf]
    %v1025 = vld [vmem:[%s6 + $0x148] sm:$0xf]
    %v1026 = vld [vmem:[%s6 + $0x14c] sm:$0xf]
    %v1027 = vld [vmem:[%s6 + $0x150] sm:$0xf]
    %v1028 = vld [vmem:[%s6 + $0x154] sm:$0xf]
    %v1029 = vld [vmem:[%s6 + $0x158] sm:$0xf]
    %v1030 = vld [vmem:[%s6 + $0x15c] sm:$0xf]
    %v1031 = vld [vmem:[%s6 + $0x160] sm:$0xf]
    %v1032 = vld [vmem:[%s6 + $0x164] sm:$0xf]
    %v1033 = vld [vmem:[%s6 + $0x168] sm:$0xf]
    %v1034 = vld [vmem:[%s6 + $0x16c] sm:$0xf]
    %v1035 = vld [vmem:[%s6 + $0x170] sm:$0xf]
    %v1036 = vld [vmem:[%s6 + $0x174] sm:$0xf]
    %v1037 = vld [vmem:[%s6 + $0x178] sm:$0xf]
    %v1038 = vld [vmem:[%s6 + $0x17c] sm:$0xf]
    %v1039 = vld [vmem:[%s6 + $0x180] sm:$0xf]
    %v1040 = vld [vmem:[%s6 + $0x184] sm:$0xf]
    %v1041 = vld [vmem:[%s6 + $0x188] sm:$0xf]
    %v1042 = vld [vmem:[%s6 + $0x18c] sm:$0xf]
    %v1043 = vld [vmem:[%s6 + $0x190] sm:$0xf]
    %v1044 = vld [vmem:[%s6 + $0x194] sm:$0xf]
    %v1045 = vld [vmem:[%s6 + $0x198] sm:$0xf]
    %v1046 = vld [vmem:[%s6 + $0x19c] sm:$0xf]
    %v1047 = vld [vmem:[%s6 + $0x1a0] sm:$0xf]
    %v1048 = vld [vmem:[%s6 + $0x1a4] sm:$0xf]
    %v1049 = vld [vmem:[%s6 + $0x1a8] sm:$0xf]
    %v1050 = vld [vmem:[%s6 + $0x1ac] sm:$0xf]
    %v1051 = vld [vmem:[%s6 + $0x1b0] sm:$0xf]
    %v1052 = vld [vmem:[%s6 + $0x1b4] sm:$0xf]
    %v1053 = vld [vmem:[%s6 + $0x1b8] sm:$0xf]
    %v1054 = vld [vmem:[%s6 + $0x1bc] sm:$0xf]
    %v1055 = vld [vmem:[%s6 + $0x1c0] sm:$0xf]
    %v1056 = vld [vmem:[%s6 + $0x1c4] sm:$0xf]
    %v1057 = vld [vmem:[%s6 + $0x1c8] sm:$0xf]
    %v1058 = vld [vmem:[%s6 + $0x1cc] sm:$0xf]
    %v1059 = vld [vmem:[%s6 + $0x1d0] sm:$0xf]
    %v1060 = vld [vmem:[%s6 + $0x1d4] sm:$0xf]
    %v1061 = vld [vmem:[%s6 + $0x1d8] sm:$0xf]
    %v1062 = vld [vmem:[%s6 + $0x1dc] sm:$0xf]
    %v1063 = vld [vmem:[%s6 + $0x1e0] sm:$0xf]
    %v1064 = vld [vmem:[%s6 + $0x1e4] sm:$0xf]
    %v1065 = vld [vmem:[%s6 + $0x1e8] sm:$0xf]
    %v1066 = vld [vmem:[%s6 + $0x1ec] sm:$0xf]
    %v1067 = vld [vmem:[%s6 + $0x1f0] sm:$0xf]
    %v1068 = vld [vmem:[%s6 + $0x1f4] sm:$0xf]
    %v1069 = vld [vmem:[%s6 + $0x1f8] sm:$0xf]
    %v1070 = vld [vmem:[%s6 + $0x1fc] sm:$0xf]
    %v1071 = vld [vmem:[%s6 + $0x200] sm:$0xf]
    %v1072 = vld [vmem:[%s6 + $0x204] sm:$0xf]
    %v1073 = vld [vmem:[%s6 + $0x208] sm:$0xf]
    %v1074 = vld [vmem:[%s6 + $0x20c] sm:$0xf]
    %v1075 = vld [vmem:[%s6 + $0x210] sm:$0xf]
    %v1076 = vld [vmem:[%s6 + $0x214] sm:$0xf]
    %v1077 = vld [vmem:[%s6 + $0x218] sm:$0xf]
    %v1078 = vld [vmem:[%s6 + $0x21c] sm:$0xf]
    %v1079 = vld [vmem:[%s6 + $0x220] sm:$0xf]
    %v1080 = vld [vmem:[%s6 + $0x224] sm:$0xf]
    %v1081 = vld [vmem:[%s6 + $0x228] sm:$0xf]
    %v1082 = vld [vmem:[%s6 + $0x22c] sm:$0xf]
    %v1083 = vld [vmem:[%s6 + $0x230] sm:$0xf]
    %v1084 = vld [vmem:[%s6 + $0x234] sm:$0xf]
    %v1085 = vld [vmem:[%s6 + $0x238] sm:$0xf]
    %v1086 = vld [vmem:[%s6 + $0x23c] sm:$0xf]
    %v1231 = vunpack.c.l.b16 %v943
    %v1232 = vunpack.c.l.b16 %v944
    %v1233 = vunpack.c.l.b16 %v945
    %v1234 = vunpack.c.l.b16 %v946
    %v1235 = vunpack.c.l.b16 %v947
    %v1236 = vunpack.c.l.b16 %v948
    %v1237 = vunpack.c.l.b16 %v949
    %v1238 = vunpack.c.l.b16 %v950
    %v1239 = vunpack.c.l.b16 %v951
    %v1240 = vunpack.c.l.b16 %v952
    %v1241 = vunpack.c.l.b16 %v953
    %v1242 = vunpack.c.l.b16 %v954
    %v1243 = vunpack.c.l.b16 %v955
    %v1244 = vunpack.c.l.b16 %v956
    %v1245 = vunpack.c.l.b16 %v957
    %v1246 = vunpack.c.l.b16 %v958
    %v1247 = vunpack.c.l.b16 %v959
    %v1248 = vunpack.c.l.b16 %v960
    %v1249 = vunpack.c.l.b16 %v961
    %v1250 = vunpack.c.l.b16 %v962
    %v1251 = vunpack.c.l.b16 %v963
    %v1252 = vunpack.c.l.b16 %v964
    %v1253 = vunpack.c.l.b16 %v965
    %v1254 = vunpack.c.l.b16 %v966
    %v1255 = vunpack.c.l.b16 %v967
    %v1256 = vunpack.c.l.b16 %v968
    %v1257 = vunpack.c.l.b16 %v969
    %v1258 = vunpack.c.l.b16 %v970
    %v1259 = vunpack.c.l.b16 %v971
    %v1260 = vunpack.c.l.b16 %v972
    %v1261 = vunpack.c.l.b16 %v973
    %v1262 = vunpack.c.l.b16 %v974
    %v1263 = vunpack.c.l.b16 %v975
    %v1264 = vunpack.c.l.b16 %v976
    %v1265 = vunpack.c.l.b16 %v977
    %v1266 = vunpack.c.l.b16 %v978
    %v1267 = vunpack.c.l.b16 %v979
    %v1268 = vunpack.c.l.b16 %v980
    %v1269 = vunpack.c.l.b16 %v981
    %v1270 = vunpack.c.l.b16 %v982
    %v1271 = vunpack.c.l.b16 %v983
    %v1272 = vunpack.c.l.b16 %v984
    %v1273 = vunpack.c.l.b16 %v985
    %v1274 = vunpack.c.l.b16 %v986
    %v1275 = vunpack.c.l.b16 %v987
    %v1276 = vunpack.c.l.b16 %v988
    %v1277 = vunpack.c.l.b16 %v989
    %v1278 = vunpack.c.l.b16 %v990
    %v1279 = vunpack.c.l.b16 %v991
    %v1280 = vunpack.c.l.b16 %v992
    %v1281 = vunpack.c.l.b16 %v993
    %v1282 = vunpack.c.l.b16 %v994
    %v1283 = vunpack.c.l.b16 %v995
    %v1284 = vunpack.c.l.b16 %v996
    %v1285 = vunpack.c.l.b16 %v997
    %v1286 = vunpack.c.l.b16 %v998
    %v1287 = vunpack.c.l.b16 %v999
    %v1288 = vunpack.c.l.b16 %v1000
    %v1289 = vunpack.c.l.b16 %v1001
    %v1290 = vunpack.c.l.b16 %v1002
    %v1291 = vunpack.c.l.b16 %v1003
    %v1292 = vunpack.c.l.b16 %v1004
    %v1293 = vunpack.c.l.b16 %v1005
    %v1294 = vunpack.c.l.b16 %v1006
    %v1295 = vunpack.c.l.b16 %v1007
    %v1296 = vunpack.c.l.b16 %v1008
    %v1297 = vunpack.c.l.b16 %v1009
    %v1298 = vunpack.c.l.b16 %v1010
    %v1299 = vunpack.c.l.b16 %v1011
    %v1300 = vunpack.c.l.b16 %v1012
    %v1301 = vunpack.c.l.b16 %v1013
    %v1302 = vunpack.c.l.b16 %v1014
    %v1303 = vunpack.c.l.b16 %v1015
    %v1304 = vunpack.c.l.b16 %v1016
    %v1305 = vunpack.c.l.b16 %v1017
    %v1306 = vunpack.c.l.b16 %v1018
    %v1307 = vunpack.c.l.b16 %v1019
    %v1308 = vunpack.c.l.b16 %v1020
    %v1309 = vunpack.c.l.b16 %v1021
    %v1310 = vunpack.c.l.b16 %v1022
    %v1311 = vunpack.c.l.b16 %v1023
    %v1312 = vunpack.c.l.b16 %v1024
    %v1313 = vunpack.c.l.b16 %v1025
    %v1314 = vunpack.c.l.b16 %v1026
    %v1315 = vunpack.c.l.b16 %v1027
    %v1316 = vunpack.c.l.b16 %v1028
    %v1317 = vunpack.c.l.b16 %v1029
    %v1318 = vunpack.c.l.b16 %v1030
    %v1319 = vunpack.c.l.b16 %v1031
    %v1320 = vunpack.c.l.b16 %v1032
    %v1321 = vunpack.c.l.b16 %v1033
    %v1322 = vunpack.c.l.b16 %v1034
    %v1323 = vunpack.c.l.b16 %v1035
    %v1324 = vunpack.c.l.b16 %v1036
    %v1325 = vunpack.c.l.b16 %v1037
    %v1326 = vunpack.c.l.b16 %v1038
    %v1327 = vunpack.c.l.b16 %v1039
    %v1328 = vunpack.c.l.b16 %v1040
    %v1329 = vunpack.c.l.b16 %v1041
    %v1330 = vunpack.c.l.b16 %v1042
    %v1331 = vunpack.c.l.b16 %v1043
    %v1332 = vunpack.c.l.b16 %v1044
    %v1333 = vunpack.c.l.b16 %v1045
    %v1334 = vunpack.c.l.b16 %v1046
    %v1335 = vunpack.c.l.b16 %v1047
    %v1336 = vunpack.c.l.b16 %v1048
    %v1337 = vunpack.c.l.b16 %v1049
    %v1338 = vunpack.c.l.b16 %v1050
    %v1339 = vunpack.c.l.b16 %v1051
    %v1340 = vunpack.c.l.b16 %v1052
    %v1341 = vunpack.c.l.b16 %v1053
    %v1342 = vunpack.c.l.b16 %v1054
    %v1343 = vunpack.c.l.b16 %v1055
    %v1344 = vunpack.c.l.b16 %v1056
    %v1345 = vunpack.c.l.b16 %v1057
    %v1346 = vunpack.c.l.b16 %v1058
    %v1347 = vunpack.c.l.b16 %v1059
    %v1348 = vunpack.c.l.b16 %v1060
    %v1349 = vunpack.c.l.b16 %v1061
    %v1350 = vunpack.c.l.b16 %v1062
    %v1351 = vunpack.c.l.b16 %v1063
    %v1352 = vunpack.c.l.b16 %v1064
    %v1353 = vunpack.c.l.b16 %v1065
    %v1354 = vunpack.c.l.b16 %v1066
    %v1355 = vunpack.c.l.b16 %v1067
    %v1356 = vunpack.c.l.b16 %v1068
    %v1357 = vunpack.c.l.b16 %v1069
    %v1358 = vunpack.c.l.b16 %v1070
    %v1359 = vunpack.c.l.b16 %v1071
    %v1360 = vunpack.c.l.b16 %v1072
    %v1361 = vunpack.c.l.b16 %v1073
    %v1362 = vunpack.c.l.b16 %v1074
    %v1363 = vunpack.c.l.b16 %v1075
    %v1364 = vunpack.c.l.b16 %v1076
    %v1365 = vunpack.c.l.b16 %v1077
    %v1366 = vunpack.c.l.b16 %v1078
    %v1367 = vunpack.c.l.b16 %v1079
    %v1368 = vunpack.c.l.b16 %v1080
    %v1369 = vunpack.c.l.b16 %v1081
    %v1370 = vunpack.c.l.b16 %v1082
    %v1371 = vunpack.c.l.b16 %v1083
    %v1372 = vunpack.c.l.b16 %v1084
    %v1373 = vunpack.c.l.b16 %v1085
    %v1374 = vunpack.c.l.b16 %v1086
    %v1375 = vpack.c.b16 %v1232, %v1231
    %v1376 = vpack.c.b16 %v1234, %v1233
    %v1377 = vpack.c.b16 %v1236, %v1235
    %v1378 = vpack.c.b16 %v1238, %v1237
    %v1379 = vpack.c.b16 %v1240, %v1239
    %v1380 = vpack.c.b16 %v1242, %v1241
    %v1381 = vpack.c.b16 %v1244, %v1243
    %v1382 = vpack.c.b16 %v1246, %v1245
    %v1383 = vpack.c.b16 %v1248, %v1247
    %v1384 = vpack.c.b16 %v1250, %v1249
    %v1385 = vpack.c.b16 %v1252, %v1251
    %v1386 = vpack.c.b16 %v1254, %v1253
    %v1387 = vpack.c.b16 %v1256, %v1255
    %v1388 = vpack.c.b16 %v1258, %v1257
    %v1389 = vpack.c.b16 %v1260, %v1259
    %v1390 = vpack.c.b16 %v1262, %v1261
    %v1391 = vpack.c.b16 %v1264, %v1263
    %v1392 = vpack.c.b16 %v1266, %v1265
    %v1393 = vpack.c.b16 %v1268, %v1267
    %v1394 = vpack.c.b16 %v1270, %v1269
    %v1395 = vpack.c.b16 %v1272, %v1271
    %v1396 = vpack.c.b16 %v1274, %v1273
    %v1397 = vpack.c.b16 %v1276, %v1275
    %v1398 = vpack.c.b16 %v1278, %v1277
    %v1399 = vpack.c.b16 %v1280, %v1279
    %v1400 = vpack.c.b16 %v1282, %v1281
    %v1401 = vpack.c.b16 %v1284, %v1283
    %v1402 = vpack.c.b16 %v1286, %v1285
    %v1403 = vpack.c.b16 %v1288, %v1287
    %v1404 = vpack.c.b16 %v1290, %v1289
    %v1405 = vpack.c.b16 %v1292, %v1291
    %v1406 = vpack.c.b16 %v1294, %v1293
    %v1407 = vpack.c.b16 %v1296, %v1295
    %v1408 = vpack.c.b16 %v1298, %v1297
    %v1409 = vpack.c.b16 %v1300, %v1299
    %v1410 = vpack.c.b16 %v1302, %v1301
    %v1411 = vpack.c.b16 %v1304, %v1303
    %v1412 = vpack.c.b16 %v1306, %v1305
    %v1413 = vpack.c.b16 %v1308, %v1307
    %v1414 = vpack.c.b16 %v1310, %v1309
    %v1415 = vpack.c.b16 %v1312, %v1311
    %v1416 = vpack.c.b16 %v1314, %v1313
    %v1417 = vpack.c.b16 %v1316, %v1315
    %v1418 = vpack.c.b16 %v1318, %v1317
    %v1419 = vpack.c.b16 %v1320, %v1319
    %v1420 = vpack.c.b16 %v1322, %v1321
    %v1421 = vpack.c.b16 %v1324, %v1323
    %v1422 = vpack.c.b16 %v1326, %v1325
    %v1423 = vpack.c.b16 %v1328, %v1327
    %v1424 = vpack.c.b16 %v1330, %v1329
    %v1425 = vpack.c.b16 %v1332, %v1331
    %v1426 = vpack.c.b16 %v1334, %v1333
    %v1427 = vpack.c.b16 %v1336, %v1335
    %v1428 = vpack.c.b16 %v1338, %v1337
    %v1429 = vpack.c.b16 %v1340, %v1339
    %v1430 = vpack.c.b16 %v1342, %v1341
    %v1431 = vpack.c.b16 %v1344, %v1343
    %v1432 = vpack.c.b16 %v1346, %v1345
    %v1433 = vpack.c.b16 %v1348, %v1347
    %v1434 = vpack.c.b16 %v1350, %v1349
    %v1435 = vpack.c.b16 %v1352, %v1351
    %v1436 = vpack.c.b16 %v1354, %v1353
    %v1437 = vpack.c.b16 %v1356, %v1355
    %v1438 = vpack.c.b16 %v1358, %v1357
    %v1439 = vpack.c.b16 %v1360, %v1359
    %v1440 = vpack.c.b16 %v1362, %v1361
    %v1441 = vpack.c.b16 %v1364, %v1363
    %v1442 = vpack.c.b16 %v1366, %v1365
    %v1443 = vpack.c.b16 %v1368, %v1367
    %v1444 = vpack.c.b16 %v1370, %v1369
    %v1445 = vpack.c.b16 %v1372, %v1371
    %v1446 = vpack.c.b16 %v1374, %v1373
    %1519 = vmatprep.subr.bf16.mxu0 0
    %1520 = vmatpush1.bf16.msra.mxu0 %v1375
    %1521 = vmatprep.subr.bf16.mxu0 0
    %1522 = vmatpush1.bf16.msra.mxu0 %v1376
    %1523 = vmatprep.subr.bf16.mxu0 0
    %1524 = vmatpush1.bf16.msra.mxu0 %v1377
    %1525 = vmatprep.subr.bf16.mxu0 0
    %1526 = vmatpush1.bf16.msra.mxu0 %v1378
    %1527 = vmatprep.subr.bf16.mxu0 0
    %1528 = vmatpush1.bf16.msra.mxu0 %v1379
    %1529 = vmatprep.subr.bf16.mxu0 0
    %1530 = vmatpush1.bf16.msra.mxu0 %v1380
    %1531 = vmatprep.subr.bf16.mxu0 0
    %1532 = vmatpush1.bf16.msra.mxu0 %v1381
    %1533 = vmatprep.subr.bf16.mxu0 0
    %1534 = vmatpush1.bf16.msra.mxu0 %v1382
    %1535 = vmatprep.subr.bf16.mxu0 0
    %1536 = vmatpush1.bf16.msra.mxu0 %v1383
    %1537 = vmatprep.subr.bf16.mxu0 0
    %1538 = vmatpush1.bf16.msra.mxu0 %v1384
    %1539 = vmatprep.subr.bf16.mxu0 0
    %1540 = vmatpush1.bf16.msra.mxu0 %v1385
    %1541 = vmatprep.subr.bf16.mxu0 0
    %1542 = vmatpush1.bf16.msra.mxu0 %v1386
    %1543 = vmatprep.subr.bf16.mxu0 0
    %1544 = vmatpush1.bf16.msra.mxu0 %v1387
    %1545 = vmatprep.subr.bf16.mxu0 0
    %1546 = vmatpush1.bf16.msra.mxu0 %v1388
    %1547 = vmatprep.subr.bf16.mxu0 0
    %1548 = vmatpush1.bf16.msra.mxu0 %v1389
    %1549 = vmatprep.subr.bf16.mxu0 0
    %1550 = vmatpush1.bf16.msra.mxu0 %v1390
    %1551 = vmatprep.mubr.bf16.mxu0 %v936
    %1552 = vmatmul.mubr.bf16.gmra.mrb[0].mxu0 %v935
    %v1553 = vpop.f32.mrb[0].mxu0
    %v1554 = vadd.f32 0.0, %v1553
    %v1555 = vpop.f32.mrb[0].mxu0
    %v1556 = vpop.f32.mrb[0].mxu0
    %v1557 = vpop.f32.mrb[0].mxu0
    %1558 = vdwg.mxu0
    %1559 = vmatprep.subr.bf16.mxu0 0
    %1560 = vmatpush1.bf16.msra.mxu0 %v1391
    %1561 = vmatprep.subr.bf16.mxu0 0
    %1562 = vmatpush1.bf16.msra.mxu0 %v1392
    %1563 = vmatprep.subr.bf16.mxu0 0
    %1564 = vmatpush1.bf16.msra.mxu0 %v1393
    %1565 = vmatprep.subr.bf16.mxu0 0
    %1566 = vmatpush1.bf16.msra.mxu0 %v1394
    %1567 = vmatprep.subr.bf16.mxu0 0
    %1568 = vmatpush1.bf16.msra.mxu0 %v1395
    %1569 = vmatprep.subr.bf16.mxu0 0
    %1570 = vmatpush1.bf16.msra.mxu0 %v1396
    %1571 = vmatprep.subr.bf16.mxu0 0
    %1572 = vmatpush1.bf16.msra.mxu0 %v1397
    %1573 = vmatprep.subr.bf16.mxu0 0
    %1574 = vmatpush1.bf16.msra.mxu0 %v1398
    %1575 = vmatprep.subr.bf16.mxu0 0
    %1576 = vmatpush1.bf16.msra.mxu0 %v1399
    %1577 = vmatprep.subr.bf16.mxu0 0
    %1578 = vmatpush1.bf16.msra.mxu0 %v1400
    %1579 = vmatprep.subr.bf16.mxu0 0
    %1580 = vmatpush1.bf16.msra.mxu0 %v1401
    %1581 = vmatprep.subr.bf16.mxu0 0
    %1582 = vmatpush1.bf16.msra.mxu0 %v1402
    %1583 = vmatprep.subr.bf16.mxu0 0
    %1584 = vmatpush1.bf16.msra.mxu0 %v1403
    %1585 = vmatprep.subr.bf16.mxu0 0
    %1586 = vmatpush1.bf16.msra.mxu0 %v1404
    %1587 = vmatprep.subr.bf16.mxu0 0
    %1588 = vmatpush1.bf16.msra.mxu0 %v1405
    %1589 = vmatprep.subr.bf16.mxu0 0
    %1590 = vmatpush1.bf16.msra.mxu0 %v1406
    %1591 = vmatprep.mubr.bf16.mxu0 %v938
    %1592 = vmatmul.mubr.bf16.gmra.mrb[0].mxu0 %v937
    %v1593 = vpop.f32.mrb[0].mxu0
    %v1594 = vadd.f32 %v1554, %v1593
    %v1595 = vpop.f32.mrb[0].mxu0
    %v1596 = vpop.f32.mrb[0].mxu0
    %v1597 = vpop.f32.mrb[0].mxu0
    %1598 = vdwg.mxu0
    %1599 = vmatprep.subr.bf16.mxu0 0
    %1600 = vmatpush1.bf16.msra.mxu0 %v1407
    %1601 = vmatprep.subr.bf16.mxu0 0
    %1602 = vmatpush1.bf16.msra.mxu0 %v1408
    %1603 = vmatprep.subr.bf16.mxu0 0
    %1604 = vmatpush1.bf16.msra.mxu0 %v1409
    %1605 = vmatprep.subr.bf16.mxu0 0
    %1606 = vmatpush1.bf16.msra.mxu0 %v1410
    %1607 = vmatprep.subr.bf16.mxu0 0
    %1608 = vmatpush1.bf16.msra.mxu0 %v1411
    %1609 = vmatprep.subr.bf16.mxu0 0
    %1610 = vmatpush1.bf16.msra.mxu0 %v1412
    %1611 = vmatprep.subr.bf16.mxu0 0
    %1612 = vmatpush1.bf16.msra.mxu0 %v1413
    %1613 = vmatprep.subr.bf16.mxu0 0
    %1614 = vmatpush1.bf16.msra.mxu0 %v1414
    %1615 = vmatprep.subr.bf16.mxu0 0
    %1616 = vmatpush1.bf16.msra.mxu0 %v1415
    %1617 = vmatprep.subr.bf16.mxu0 0
    %1618 = vmatpush1.bf16.msra.mxu0 %v1416
    %1619 = vmatprep.subr.bf16.mxu0 0
    %1620 = vmatpush1.bf16.msra.mxu0 %v1417
    %1621 = vmatprep.subr.bf16.mxu0 0
    %1622 = vmatpush1.bf16.msra.mxu0 %v1418
    %1623 = vmatprep.subr.bf16.mxu0 0
    %1624 = vmatpush1.bf16.msra.mxu0 %v1419
    %1625 = vmatprep.subr.bf16.mxu0 0
    %1626 = vmatpush1.bf16.msra.mxu0 %v1420
    %1627 = vmatprep.subr.bf16.mxu0 0
    %1628 = vmatpush1.bf16.msra.mxu0 %v1421
    %1629 = vmatprep.subr.bf16.mxu0 0
    %1630 = vmatpush1.bf16.msra.mxu0 %v1422
    %1631 = vmatprep.mubr.bf16.mxu0 %v940
    %1632 = vmatmul.mubr.bf16.gmra.mrb[0].mxu0 %v939
    %v1633 = vpop.f32.mrb[0].mxu0
    %v1634 = vadd.f32 %v1594, %v1633
    %v1635 = vpop.f32.mrb[0].mxu0
    %v1636 = vpop.f32.mrb[0].mxu0
    %v1637 = vpop.f32.mrb[0].mxu0
    %1638 = vdwg.mxu0
    %1639 = vmatprep.subr.bf16.mxu0 0
    %1640 = vmatpush1.bf16.msra.mxu0 %v1423
    %1641 = vmatprep.subr.bf16.mxu0 0
    %1642 = vmatpush1.bf16.msra.mxu0 %v1424
    %1643 = vmatprep.subr.bf16.mxu0 0
    %1644 = vmatpush1.bf16.msra.mxu0 %v1425
    %1645 = vmatprep.subr.bf16.mxu0 0
    %1646 = vmatpush1.bf16.msra.mxu0 %v1426
    %1647 = vmatprep.subr.bf16.mxu0 0
    %1648 = vmatpush1.bf16.msra.mxu0 %v1427
    %1649 = vmatprep.subr.bf16.mxu0 0
    %1650 = vmatpush1.bf16.msra.mxu0 %v1428
    %1651 = vmatprep.subr.bf16.mxu0 0
    %1652 = vmatpush1.bf16.msra.mxu0 %v1429
    %1653 = vmatprep.subr.bf16.mxu0 0
    %1654 = vmatpush1.bf16.msra.mxu0 %v1430
    %1655 = vmatprep.subr.bf16.mxu0 0
    %1656 = vmatpush1.bf16.msra.mxu0 %v1431
    %1657 = vmatprep.subr.bf16.mxu0 0
    %1658 = vmatpush1.bf16.msra.mxu0 %v1432
    %1659 = vmatprep.subr.bf16.mxu0 0
    %1660 = vmatpush1.bf16.msra.mxu0 %v1433
    %1661 = vmatprep.subr.bf16.mxu0 0
    %1662 = vmatpush1.bf16.msra.mxu0 %v1434
    %1663 = vmatprep.subr.bf16.mxu0 0
    %1664 = vmatpush1.bf16.msra.mxu0 %v1435
    %1665 = vmatprep.subr.bf16.mxu0 0
    %1666 = vmatpush1.bf16.msra.mxu0 %v1436
    %1667 = vmatprep.subr.bf16.mxu0 0
    %1668 = vmatpush1.bf16.msra.mxu0 %v1437
    %1669 = vmatprep.subr.bf16.mxu0 0
    %1670 = vmatpush1.bf16.msra.mxu0 %v1438
    %1671 = vmatprep.mubr.bf16.mxu0 %v942
    %1672 = vmatmul.mubr.bf16.gmra.mrb[0].mxu0 %v941
    %v1673 = vpop.f32.mrb[0].mxu0
    %v1674 = vadd.f32 %v1634, %v1673
    %v1675 = vpop.f32.mrb[0].mxu0
    %v1676 = vpop.f32.mrb[0].mxu0
    %v1677 = vpop.f32.mrb[0].mxu0
    %1678 = vdwg.mxu0
    %1679 = vmatprep.subr.bf16.mxu0 0
    %1680 = vmatpush1.bf16.msra.mxu0 %v1439
    %1681 = vmatprep.subr.bf16.mxu0 0
    %1682 = vmatpush1.bf16.msra.mxu0 %v1440
    %1683 = vmatprep.subr.bf16.mxu0 0
    %1684 = vmatpush1.bf16.msra.mxu0 %v1441
    %1685 = vmatprep.subr.bf16.mxu0 0
    %1686 = vmatpush1.bf16.msra.mxu0 %v1442
    %1687 = vmatprep.subr.bf16.mxu0 0
    %1688 = vmatpush1.bf16.msra.mxu0 %v1443
    %1689 = vmatprep.subr.bf16.mxu0 0
    %1690 = vmatpush1.bf16.msra.mxu0 %v1444
    %1691 = vmatprep.subr.bf16.mxu0 0
    %1692 = vmatpush1.bf16.msra.mxu0 %v1445
    %1693 = vmatprep.subr.bf16.mxu0 0
    %1694 = vmatpush1.bf16.msra.mxu0 %v1446
    %1695 = vmatprep.subr.bf16.mxu0 0
    %1696 = vmatpush1.bf16.msra.mxu0 0
    %1697 = vmatprep.subr.bf16.mxu0 0
    %1698 = vmatpush1.bf16.msra.mxu0 0
    %1699 = vmatprep.subr.bf16.mxu0 0
    %1700 = vmatpush1.bf16.msra.mxu0 0
    %1701 = vmatprep.subr.bf16.mxu0 0
    %1702 = vmatpush1.bf16.msra.mxu0 0
    %1703 = vmatprep.subr.bf16.mxu0 0
    %1704 = vmatpush1.bf16.msra.mxu0 0
    %1705 = vmatprep.subr.bf16.mxu0 0
    %1706 = vmatpush1.bf16.msra.mxu0 0
    %1707 = vmatprep.subr.bf16.mxu0 0
    %1708 = vmatpush1.bf16.msra.mxu0 0
    %1709 = vmatprep.subr.bf16.mxu0 0
    %1710 = vmatpush1.bf16.msra.mxu0 0
    %1711 = vmatprep.mubr.bf16.mxu0 0
    %1712 = vmatmul.mubr.bf16.gmra.mrb[0].mxu0 %v133
    %v1713 = vpop.f32.mrb[0].mxu0
    %v1714 = vadd.f32 %v1674, %v1713
    %v1715 = vpop.f32.mrb[0].mxu0
    %v1716 = vpop.f32.mrb[0].mxu0
    %v1717 = vpop.f32.mrb[0].mxu0
    %1718 = vdwg.mxu0
    %v1719 = vtanh.pop %v1714
    %v1720 = vsub.f32 1.0, %v915
    %1722 = vrot.lane.b32.xlu0 %v917, 32
    %v1723 = vpop.permute.xlu0 %1722
    %v1725 = vmul.f32 %v1720, %v1723
    %1727 = vrot.lane.b32.xlu0 %v1719, 32
    %v1728 = vpop.permute.xlu0 %1727
    %v1730 = vmul.f32 %v915, %v1728
    %v1731 = vadd.f32 %v1725, %v1730
    %1733 = vrot.lane.b32.xlu0 %v1731, 96
    %v1734 = vpop.permute.xlu0 %1733
    %1736 = vst.msk [vmem:[#allocation2] sm:$0xff] %vm923, %v1734
    // Predicated region
    $region30: #{agcrn_cell_forward.1} parent=1 // pred_check
      _
    $region31: #{agcrn_cell_forward.1} parent=1 // pred_check_branch
      %1738 = sbr.rel (0) target = $region33
    $region32: #{agcrn_cell_forward.1} parent=1 // pred_region
      %s1740 = ssub.s32 128, 128
      %1741 = vsyncadd [#allocation3], %s1740
      %s1743 = sshll.u32 [#allocation2], 4
      %s1744 = int_to_ptr.vmem [resolvable:$true] %s1743
      %1746 = dma.vmem_to_hbm [thread:$0]  %s1744, 128, %s7, [#allocation3]
    $region33: #{agcrn_cell_forward.1} parent=1 // pred_fallthru
      _
    // Predicated region
    $region34: #{agcrn_cell_forward.1} parent=1 // pred_check
      _
    $region35: #{agcrn_cell_forward.1} parent=1 // pred_check_branch
      %1748 = sbr.rel (0) target = $region37
    $region36: #{agcrn_cell_forward.1} parent=1 // pred_region
      %1749 = dma.done [#allocation3], 128
    $region37: #{agcrn_cell_forward.1} parent=1 // pred_fallthru
      _
    %1750 = vsyncpa [#allocation3], 1

</llo_original>
